<compile_context>
chip_gen: v7x
topology: tpu7x:2x2x1
jax: 0.10.0
libtpu: 0.0.40
codegen_flags: <defaults>
</compile_context>

<pallas_src>
import math

import jax
import jax.numpy as jnp
from jax.experimental import pallas as pl
from jax.experimental.pallas import tpu as pltpu

OBS_DIM = 24          # gym BipedalWalker-v3 observation_space.shape == (24,)
OBS_PAD = 32          # padded contraction dim for layer 1 (multiple of 8)
FC1_DIMS = 1024
FC2_DIMS = 512
OUT_DIM = 1


def critic_kernel(x_ref, w1_ref, b1_ref, w2_ref, b2_ref, w3_ref, b3_ref, o_ref):
    # Weights arrive in bf16 (halved HBM traffic, MXU-native); activations are
    # cast to bf16 at the MXU inputs while accumulation stays f32.
    x = x_ref[...].astype(jnp.bfloat16)                                   # (TB, 32)
    h1 = jnp.dot(x, w1_ref[...], preferred_element_type=jnp.float32) + b1_ref[...]
    h1 = jnp.maximum(h1, 0.0).astype(jnp.bfloat16)                        # (TB, 1024)
    h2 = jnp.dot(h1, w2_ref[...], preferred_element_type=jnp.float32) + b2_ref[...]
    h2 = jnp.maximum(h2, 0.0)                                             # (TB, 512) f32
    # Final layer has a single output column: do it on the VPU + cross-lane
    # reduce instead of wasting an MXU pass on a 1-wide result tile.
    w3_row = w3_ref[...].astype(jnp.float32)                              # (1, 512)
    out = jnp.sum(h2 * w3_row, axis=-1, keepdims=True) + b3_ref[...]      # (TB, 1)
    o_ref[...] = out.astype(o_ref.dtype)


def prepare_params(params):
    """Cast weights to bf16, zero-pad W1's contraction dim 24->32, and lay the
    final weight out as a (1, 512) row for the in-kernel VPU reduction.
    Do this once outside the hot loop."""
    w1, b1, w2, b2, w3, b3 = params
    w1p = jnp.zeros((OBS_PAD, FC1_DIMS), jnp.bfloat16)
    w1p = w1p.at[:OBS_DIM, :].set(w1.astype(jnp.bfloat16))
    return (
        w1p,
        b1.astype(jnp.float32),
        w2.astype(jnp.bfloat16),
        b2.astype(jnp.float32),
        w3.T.astype(jnp.bfloat16),    # (1, FC2_DIMS)
        b3.astype(jnp.float32),       # (1, 1)
    )


def critic_forward(state, prepared, *, tb=256):
    """state: (B, 24) f32. Returns (B, 1) f32."""
    w1, b1, w2, b2, w3r, b3 = prepared
    B = state.shape[0]
    # Tile the batch; small batches collapse to a single (8-aligned) tile.
    TB = tb if B >= tb else max(8, ((B + 7) // 8) * 8)
    num_blocks = pl.cdiv(B, TB)
    Bp = num_blocks * TB
    # Zero-pad batch rows to a tile multiple and obs features 24 -> 32.
    xp = jnp.zeros((Bp, OBS_PAD), jnp.float32)
    xp = xp.at[:B, :OBS_DIM].set(state.astype(jnp.float32))

    out = pl.pallas_call(
        critic_kernel,
        out_shape=jax.ShapeDtypeStruct((Bp, OUT_DIM), jnp.float32),
        grid=(num_blocks,),
        in_specs=[
            pl.BlockSpec((TB, OBS_PAD), lambda i: (i, 0)),          # state tile
            pl.BlockSpec((OBS_PAD, FC1_DIMS), lambda i: (0, 0)),    # W1 (resident)
            pl.BlockSpec((1, FC1_DIMS), lambda i: (0, 0)),          # b1
            pl.BlockSpec((FC1_DIMS, FC2_DIMS), lambda i: (0, 0)),   # W2 (resident)
            pl.BlockSpec((1, FC2_DIMS), lambda i: (0, 0)),          # b2
            pl.BlockSpec((1, FC2_DIMS), lambda i: (0, 0)),          # W3 row
            pl.BlockSpec((1, 1), lambda i: (0, 0)),                 # b3
        ],
        out_specs=pl.BlockSpec((TB, OUT_DIM), lambda i: (i, 0)),
        compiler_params=pltpu.CompilerParams(
            dimension_semantics=("parallel",),
            vmem_limit_bytes=16 << 20,
        ),
    )(xp, w1, b1, w2, b2, w3r, b3)
    return out[:B]


def init_params(key):
    """Deterministic init mimicking PyTorch's nn.Linear default:
    U(-1/sqrt(fan_in), 1/sqrt(fan_in)) for both weights and biases."""
    dims = [(OBS_DIM, FC1_DIMS), (FC1_DIMS, FC2_DIMS), (FC2_DIMS, OUT_DIM)]
    params = []
    for (fan_in, fan_out) in dims:
        key, kw, kb = jax.random.split(key, 3)
        bound = 1.0 / math.sqrt(fan_in)
        w = jax.random.uniform(kw, (fan_in, fan_out), jnp.float32, -bound, bound)
        b = jax.random.uniform(kb, (1, fan_out), jnp.float32, -bound, bound)
        params += [w, b]
    return tuple(params)


def reference_forward(state, params):
    w1, b1, w2, b2, w3, b3 = params
    h1 = jnp.maximum(state @ w1 + b1, 0.0)
    h2 = jnp.maximum(h1 @ w2 + b2, 0.0)
    return h2 @ w3 + b3


if __name__ == "__main__":
    key = jax.random.PRNGKey(0)
    key, kx = jax.random.split(key)

    B = 8
    state = jax.random.normal(kx, (B, OBS_DIM), jnp.float32)
    params = init_params(key)
    prepared = prepare_params(params)

    out = critic_forward(state, prepared)
    out = jax.block_until_ready(out)

    ref = reference_forward(state, params)
    assert out.shape == (B, OUT_DIM)
    # bf16 weight storage (f32 accumulation) vs the pure-f32 reference.
    assert jnp.allclose(out, ref, atol=3e-2, rtol=3e-2), (
        float(jnp.max(jnp.abs(out - ref))))

    print("KERNEL_OK")
</pallas_src>

<mosaic_0001>
module attributes {stable_mosaic.version = 11 : i64} {
  func.func @critic_kernel(%arg0: i32, %arg1: memref<8x32xf32, #tpu.memory_space<vmem>>, %arg2: memref<32x1024xbf16, #tpu.memory_space<vmem>>, %arg3: memref<1x1024xf32, #tpu.memory_space<vmem>>, %arg4: memref<1024x512xbf16, #tpu.memory_space<vmem>>, %arg5: memref<1x512xf32, #tpu.memory_space<vmem>>, %arg6: memref<1x512xbf16, #tpu.memory_space<vmem>>, %arg7: memref<1x1xf32, #tpu.memory_space<vmem>>, %arg8: memref<8x1xf32, #tpu.memory_space<vmem>>) attributes {dimension_semantics = [#tpu.dimension_semantics<parallel>], iteration_bounds = array<i64: 1>, scalar_prefetch = 0 : i64, scratch_operands = 0 : i64, tpu.core_type = #tpu.core_type<tc>, window_params = [{transform_indices = @transform_0, window_bounds = array<i64: 8, 32>}, {pipeline_mode = #tpu.pipeline_mode<synchronous>, transform_indices = @transform_1, window_bounds = array<i64: 32, 1024>}, {pipeline_mode = #tpu.pipeline_mode<synchronous>, transform_indices = @transform_2, window_bounds = array<i64: 1, 1024>}, {pipeline_mode = #tpu.pipeline_mode<synchronous>, transform_indices = @transform_3, window_bounds = array<i64: 1024, 512>}, {pipeline_mode = #tpu.pipeline_mode<synchronous>, transform_indices = @transform_4, window_bounds = array<i64: 1, 512>}, {pipeline_mode = #tpu.pipeline_mode<synchronous>, transform_indices = @transform_5, window_bounds = array<i64: 1, 512>}, {pipeline_mode = #tpu.pipeline_mode<synchronous>, transform_indices = @transform_6, window_bounds = array<i64: 1, 1>}, {transform_indices = @transform_7, window_bounds = array<i64: 8, 1>}]} {
    %c0 = arith.constant 0 : index
    %c0_0 = arith.constant 0 : index
    %0 = vector.load %arg1[%c0, %c0_0] : memref<8x32xf32, #tpu.memory_space<vmem>>, vector<8x32xf32>
    %1 = arith.truncf %0 : vector<8x32xf32> to vector<8x32xbf16>
    %c0_1 = arith.constant 0 : index
    %c0_2 = arith.constant 0 : index
    %2 = vector.load %arg2[%c0_1, %c0_2] : memref<32x1024xbf16, #tpu.memory_space<vmem>>, vector<32x1024xbf16>
    %cst = arith.constant dense<0.000000e+00> : vector<8x1024xf32>
    %3 = tpu.matmul %1, %2, %cst {dimension_numbers = #tpu.dot_dimension_numbers<[1], [0], [0], [1], [0, 0, 1, 1], [], []>} : vector<8x32xbf16>, vector<32x1024xbf16>, vector<8x1024xf32> -> vector<8x1024xf32>
    %c0_3 = arith.constant 0 : index
    %c0_4 = arith.constant 0 : index
    %4 = vector.load %arg3[%c0_3, %c0_4] : memref<1x1024xf32, #tpu.memory_space<vmem>>, vector<1x1024xf32>
    %5 = vector.broadcast %4 : vector<1x1024xf32> to vector<8x1024xf32>
    %6 = arith.addf %3, %5 : vector<8x1024xf32>
    %cst_5 = arith.constant 0.000000e+00 : f32
    %7 = vector.broadcast %cst_5 : f32 to vector<8x1024xf32>
    %8 = arith.maximumf %6, %7 : vector<8x1024xf32>
    %9 = arith.truncf %8 : vector<8x1024xf32> to vector<8x1024xbf16>
    %c0_6 = arith.constant 0 : index
    %c0_7 = arith.constant 0 : index
    %10 = vector.load %arg4[%c0_6, %c0_7] : memref<1024x512xbf16, #tpu.memory_space<vmem>>, vector<1024x512xbf16>
    %cst_8 = arith.constant dense<0.000000e+00> : vector<8x512xf32>
    %11 = tpu.matmul %9, %10, %cst_8 {dimension_numbers = #tpu.dot_dimension_numbers<[1], [0], [0], [1], [0, 0, 1, 1], [], []>} : vector<8x1024xbf16>, vector<1024x512xbf16>, vector<8x512xf32> -> vector<8x512xf32>
    %c0_9 = arith.constant 0 : index
    %c0_10 = arith.constant 0 : index
    %12 = vector.load %arg5[%c0_9, %c0_10] : memref<1x512xf32, #tpu.memory_space<vmem>>, vector<1x512xf32>
    %13 = vector.broadcast %12 : vector<1x512xf32> to vector<8x512xf32>
    %14 = arith.addf %11, %13 : vector<8x512xf32>
    %cst_11 = arith.constant 0.000000e+00 : f32
    %15 = vector.broadcast %cst_11 : f32 to vector<8x512xf32>
    %16 = arith.maximumf %14, %15 : vector<8x512xf32>
    %c0_12 = arith.constant 0 : index
    %c0_13 = arith.constant 0 : index
    %17 = vector.load %arg6[%c0_12, %c0_13] : memref<1x512xbf16, #tpu.memory_space<vmem>>, vector<1x512xbf16>
    %18 = arith.extf %17 : vector<1x512xbf16> to vector<1x512xf32>
    %19 = vector.broadcast %18 : vector<1x512xf32> to vector<8x512xf32>
    %20 = arith.mulf %16, %19 : vector<8x512xf32>
    %cst_14 = arith.constant dense<0.000000e+00> : vector<8xf32>
    %21 = vector.multi_reduction <add>, %20, %cst_14 [1] : vector<8x512xf32> to vector<8xf32>
    %22 = vector.shape_cast %21 : vector<8xf32> to vector<8x1xf32>
    %c0_15 = arith.constant 0 : index
    %c0_16 = arith.constant 0 : index
    %23 = vector.load %arg7[%c0_15, %c0_16] : memref<1x1xf32, #tpu.memory_space<vmem>>, vector<1x1xf32>
    %24 = vector.broadcast %23 : vector<1x1xf32> to vector<8x1xf32>
    %25 = arith.addf %22, %24 : vector<8x1xf32>
    %c0_17 = arith.constant 0 : index
    %c0_18 = arith.constant 0 : index
    %26 = vector.load %arg8[%c0_17, %c0_18] : memref<8x1xf32, #tpu.memory_space<vmem>>, vector<8x1xf32>
    tpu.vector_store %arg8[%c0_17, %c0_18], %25 {strides = array<i32>} : memref<8x1xf32, #tpu.memory_space<vmem>>, vector<8x1xf32>,
    return
  }
  func.func @transform_0(%arg0: i32) -> (i32, i32) {
    %c0_i32 = arith.constant 0 : i32
    %c0_i32_0 = arith.constant 0 : i32
    return %arg0, %c0_i32 : i32, i32
  }
  func.func @transform_1(%arg0: i32) -> (i32, i32) {
    %c0_i32 = arith.constant 0 : i32
    %c0_i32_0 = arith.constant 0 : i32
    %c0_i32_1 = arith.constant 0 : i32
    return %c0_i32, %c0_i32_0 : i32, i32
  }
  func.func @transform_2(%arg0: i32) -> (i32, i32) {
    %c0_i32 = arith.constant 0 : i32
    %c0_i32_0 = arith.constant 0 : i32
    %c0_i32_1 = arith.constant 0 : i32
    return %c0_i32, %c0_i32_0 : i32, i32
  }
  func.func @transform_3(%arg0: i32) -> (i32, i32) {
    %c0_i32 = arith.constant 0 : i32
    %c0_i32_0 = arith.constant 0 : i32
    %c0_i32_1 = arith.constant 0 : i32
    return %c0_i32, %c0_i32_0 : i32, i32
  }
  func.func @transform_4(%arg0: i32) -> (i32, i32) {
    %c0_i32 = arith.constant 0 : i32
    %c0_i32_0 = arith.constant 0 : i32
    %c0_i32_1 = arith.constant 0 : i32
    return %c0_i32, %c0_i32_0 : i32, i32
  }
  func.func @transform_5(%arg0: i32) -> (i32, i32) {
    %c0_i32 = arith.constant 0 : i32
    %c0_i32_0 = arith.constant 0 : i32
    %c0_i32_1 = arith.constant 0 : i32
    return %c0_i32, %c0_i32_0 : i32, i32
  }
  func.func @transform_6(%arg0: i32) -> (i32, i32) {
    %c0_i32 = arith.constant 0 : i32
    %c0_i32_0 = arith.constant 0 : i32
    %c0_i32_1 = arith.constant 0 : i32
    return %c0_i32, %c0_i32_0 : i32, i32
  }
  func.func @transform_7(%arg0: i32) -> (i32, i32) {
    %c0_i32 = arith.constant 0 : i32
    %c0_i32_0 = arith.constant 0 : i32
    return %arg0, %c0_i32 : i32, i32
  }
}

</mosaic_0001>

<llo_original>
// kernel: tpu_custom_call.1
$region0: #{tpu_custom_call.1}
  #allocation0 [shape = 'u32[]', space=smem, size = 0x4, offset = 0x4, fixed_abs, tag = 'smem constant byte address 0x4 - core index']
  #allocation1 [shape = 'u32[144,128]{1,0:T(1,128)}', space=vmem, size = 0x12000, scoped, tag = 'internal scratch']
  #allocation2 [shape = 'f32[1,1]{1,0:T(1,128)S(1)}', space=vmem, size = 0x200, scoped, tag = 'scoped memory for tpu_custom_call.1']
  %s0 = inlined_call_operand.hbm [shape: f32[8,32], index: 0, kind: input, shape index: {}]
  %s1 = inlined_call_operand.hbm [shape: bf16[32,1024], index: 1, kind: input, shape index: {}]
  %s2 = inlined_call_operand.vmem [shape: f32[1,1024], index: 2, kind: input, shape index: {}]
  %s3 = inlined_call_operand.hbm [shape: bf16[1024,512], index: 3, kind: input, shape index: {}]
  %s4 = inlined_call_operand.vmem [shape: f32[1,512], index: 4, kind: input, shape index: {}]
  %s5 = inlined_call_operand.vmem [shape: bf16[1,512], index: 5, kind: input, shape index: {}]
  %s6 = inlined_call_operand.<no memory space> [shape: f32[1,1], index: 6, kind: input, shape index: {}]
  %s7 = inlined_call_operand.vmem [shape: f32[8,1], index: 7, kind: output, shape index: {}]
  %s8 = sld [smem:[#allocation0]]
  $region50: #{tpu_custom_call.1} parent=0
    _
  %s10 = ssub.s32 1, %s8
  %s11 = scalar_select 0, %s10, %s8
  %v12 = vstv %s6
  %13 = vst [vmem:[#allocation2] sm:$0x1] %v12
  $region1: #{tpu_custom_call.1} parent=0
    #allocation3 [shape = 'u8[4096]{0}', space=vmem, size = 0x1000, scoped, tag = 'input window, operand 0, single buffered']
    #allocation4 [shape = 's32[1]{0}', space=sflag, size = 0x4, scoped, tag = 'scoped memory for tpu_custom_call.1']
    #allocation5 [shape = 'u8[65536]{0}', space=vmem, size = 0x10000, scoped, tag = 'input window, operand 1, single buffered']
    #allocation6 [shape = 's32[1]{0}', space=sflag, size = 0x4, scoped, tag = 'scoped memory for tpu_custom_call.1']
    #allocation7 [shape = 'u8[1048576]{0}', space=vmem, size = 0x100000, scoped, tag = 'input window, operand 3, single buffered']
    %14 = vsyncpa [#allocation4], 0
    %15 = vsyncpa [#allocation6], 0
    // Predicated region
    $region2: #{tpu_custom_call.1} parent=1 // pred_check
      _
    $region3: #{tpu_custom_call.1} parent=1 // pred_check_branch
      %17 = sbr.rel (0) target = $region5
    $region4: #{tpu_custom_call.1} parent=1 // pred_region
      %s19 = ssub.s32 128, 128
      %20 = vsyncadd [#allocation4], %s19
      %s22 = sshll.u32 [#allocation3], 4
      %s23 = int_to_ptr.vmem [resolvable:$true] %s22
      %25 = dma.hbm_to_vmem [thread:$0]  %s0, 128, %s23, [#allocation4]
    $region5: #{tpu_custom_call.1} parent=1 // pred_fallthru
      _
    // Predicated region
    $region6: #{tpu_custom_call.1} parent=1 // pred_check
      _
    $region7: #{tpu_custom_call.1} parent=1 // pred_check_branch
      %27 = sbr.rel (0) target = $region9
    $region8: #{tpu_custom_call.1} parent=1 // pred_region
      %s29 = ssub.s32 2048, 2048
      %30 = vsyncadd [#allocation6], %s29
      %s31 = sshll.u32 [#allocation5], 4
      %s32 = int_to_ptr.vmem [resolvable:$true] %s31
      %37 = dma.hbm_to_vmem [thread:$0]  %s1, 2048, %s32, [#allocation6], 512, 512, 32
    $region9: #{tpu_custom_call.1} parent=1 // pred_fallthru
      _
    // Predicated region
    $region10: #{tpu_custom_call.1} parent=1 // pred_check
      _
    $region11: #{tpu_custom_call.1} parent=1 // pred_check_branch
      %39 = sbr.rel (0) target = $region13
    $region12: #{tpu_custom_call.1} parent=1 // pred_region
      _
    $region13: #{tpu_custom_call.1} parent=1 // pred_fallthru
      _
    // Predicated region
    $region14: #{tpu_custom_call.1} parent=1 // pred_check
      _
    $region15: #{tpu_custom_call.1} parent=1 // pred_check_branch
      %41 = sbr.rel (0) target = $region17
    $region16: #{tpu_custom_call.1} parent=1 // pred_region
      %s43 = ssub.s32 32768, 32768
      %44 = vsyncadd [#allocation6], %s43
      %s45 = sshll.u32 [#allocation7], 4
      %s46 = int_to_ptr.vmem [resolvable:$true] %s45
      %51 = dma.hbm_to_vmem [thread:$0]  %s3, 32768, %s46, [#allocation6], 256, 256, 16
    $region17: #{tpu_custom_call.1} parent=1 // pred_fallthru
      _
    // Predicated region
    $region18: #{tpu_custom_call.1} parent=1 // pred_check
      _
    $region19: #{tpu_custom_call.1} parent=1 // pred_check_branch
      %53 = sbr.rel (0) target = $region21
    $region20: #{tpu_custom_call.1} parent=1 // pred_region
      _
    $region21: #{tpu_custom_call.1} parent=1 // pred_fallthru
      _
    // Predicated region
    $region22: #{tpu_custom_call.1} parent=1 // pred_check
      _
    $region23: #{tpu_custom_call.1} parent=1 // pred_check_branch
      %55 = sbr.rel (0) target = $region25
    $region24: #{tpu_custom_call.1} parent=1 // pred_region
      _
    $region25: #{tpu_custom_call.1} parent=1 // pred_fallthru
      _
    // Predicated region
    $region26: #{tpu_custom_call.1} parent=1 // pred_check
      _
    $region27: #{tpu_custom_call.1} parent=1 // pred_check_branch
      %57 = sbr.rel (0) target = $region29
    $region28: #{tpu_custom_call.1} parent=1 // pred_region
      _
    $region29: #{tpu_custom_call.1} parent=1 // pred_fallthru
      _
    // Predicated region
    $region30: #{tpu_custom_call.1} parent=1 // pred_check
      _
    $region31: #{tpu_custom_call.1} parent=1 // pred_check_branch
      %59 = sbr.rel (0) target = $region33
    $region32: #{tpu_custom_call.1} parent=1 // pred_region
      %60 = dma.done [#allocation4], 128
    $region33: #{tpu_custom_call.1} parent=1 // pred_fallthru
      _
    // Predicated region
    $region34: #{tpu_custom_call.1} parent=1 // pred_check
      _
    $region35: #{tpu_custom_call.1} parent=1 // pred_check_branch
      %62 = sbr.rel (0) target = $region37
    $region36: #{tpu_custom_call.1} parent=1 // pred_region
      %63 = dma.done [#allocation6], 2048
    $region37: #{tpu_custom_call.1} parent=1 // pred_fallthru
      _
    // Predicated region
    $region38: #{tpu_custom_call.1} parent=1 // pred_check
      _
    $region39: #{tpu_custom_call.1} parent=1 // pred_check_branch
      %65 = sbr.rel (0) target = $region41
    $region40: #{tpu_custom_call.1} parent=1 // pred_region
      %66 = dma.done [#allocation6], 32768
    $region41: #{tpu_custom_call.1} parent=1 // pred_fallthru
      _
    %v68 = vld [vmem:[#allocation3] sm:$0xff]
    %v69 = vpack.c.bf16 %v68, %v68
    %v70 = vld [vmem:[#allocation5] sm:$0xff]
    %v71 = vld [vmem:[#allocation5 + $0x8] sm:$0xff]
    %v72 = vld [vmem:[#allocation5 + $0x10] sm:$0xff]
    %v73 = vld [vmem:[#allocation5 + $0x18] sm:$0xff]
    %v74 = vld [vmem:[#allocation5 + $0x20] sm:$0xff]
    %v75 = vld [vmem:[#allocation5 + $0x28] sm:$0xff]
    %v76 = vld [vmem:[#allocation5 + $0x30] sm:$0xff]
    %v77 = vld [vmem:[#allocation5 + $0x38] sm:$0xff]
    %v78 = vld [vmem:[#allocation5 + $0x40] sm:$0xff]
    %v79 = vld [vmem:[#allocation5 + $0x48] sm:$0xff]
    %v80 = vld [vmem:[#allocation5 + $0x50] sm:$0xff]
    %v81 = vld [vmem:[#allocation5 + $0x58] sm:$0xff]
    %v82 = vld [vmem:[#allocation5 + $0x60] sm:$0xff]
    %v83 = vld [vmem:[#allocation5 + $0x68] sm:$0xff]
    %v84 = vld [vmem:[#allocation5 + $0x70] sm:$0xff]
    %v85 = vld [vmem:[#allocation5 + $0x78] sm:$0xff]
    %v86 = vld [vmem:[%s2] sm:$0xff]
    %v88 = vlaneseq
    %v89 = vshrl.u32 %v88, 7
    %v90 = vsub.s32 0, %v89
    %v91 = vrot.slane %v86, %v90
    %v92 = vlaneseq
    %v93 = vshrl.u32 %v92, 7
    %v94 = vsub.s32 1, %v93
    %v95 = vrot.slane %v86, %v94
    %v96 = vlaneseq
    %v97 = vshrl.u32 %v96, 7
    %v98 = vsub.s32 2, %v97
    %v99 = vrot.slane %v86, %v98
    %v100 = vlaneseq
    %v101 = vshrl.u32 %v100, 7
    %v102 = vsub.s32 3, %v101
    %v103 = vrot.slane %v86, %v102
    %v104 = vlaneseq
    %v105 = vshrl.u32 %v104, 7
    %v106 = vsub.s32 4, %v105
    %v107 = vrot.slane %v86, %v106
    %v108 = vlaneseq
    %v109 = vshrl.u32 %v108, 7
    %v110 = vsub.s32 5, %v109
    %v111 = vrot.slane %v86, %v110
    %v112 = vlaneseq
    %v113 = vshrl.u32 %v112, 7
    %v114 = vsub.s32 6, %v113
    %v115 = vrot.slane %v86, %v114
    %v116 = vlaneseq
    %v117 = vshrl.u32 %v116, 7
    %v118 = vsub.s32 7, %v117
    %v119 = vrot.slane %v86, %v118
    %v144 = vunpack.c.l.b16 %v70
    %v145 = vunpack.c.h.b16 %v70
    %v146 = vunpack.c.l.b16 %v71
    %v147 = vunpack.c.h.b16 %v71
    %v148 = vunpack.c.l.b16 %v72
    %v149 = vunpack.c.h.b16 %v72
    %v150 = vunpack.c.l.b16 %v73
    %v151 = vunpack.c.h.b16 %v73
    %v152 = vunpack.c.l.b16 %v74
    %v153 = vunpack.c.h.b16 %v74
    %v154 = vunpack.c.l.b16 %v75
    %v155 = vunpack.c.h.b16 %v75
    %v156 = vunpack.c.l.b16 %v76
    %v157 = vunpack.c.h.b16 %v76
    %v158 = vunpack.c.l.b16 %v77
    %v159 = vunpack.c.h.b16 %v77
    %v160 = vunpack.c.l.b16 %v78
    %v161 = vunpack.c.h.b16 %v78
    %v162 = vunpack.c.l.b16 %v79
    %v163 = vunpack.c.h.b16 %v79
    %v164 = vunpack.c.l.b16 %v80
    %v165 = vunpack.c.h.b16 %v80
    %v166 = vunpack.c.l.b16 %v81
    %v167 = vunpack.c.h.b16 %v81
    %v168 = vunpack.c.l.b16 %v82
    %v169 = vunpack.c.h.b16 %v82
    %v170 = vunpack.c.l.b16 %v83
    %v171 = vunpack.c.h.b16 %v83
    %v172 = vunpack.c.l.b16 %v84
    %v173 = vunpack.c.h.b16 %v84
    %v174 = vunpack.c.l.b16 %v85
    %v175 = vunpack.c.h.b16 %v85
    %v176 = vpack.c.b16 %v152, %v144
    %v177 = vpack.c.b16 %v153, %v145
    %v178 = vpack.c.b16 %v154, %v146
    %v179 = vpack.c.b16 %v155, %v147
    %v180 = vpack.c.b16 %v156, %v148
    %v181 = vpack.c.b16 %v157, %v149
    %v182 = vpack.c.b16 %v158, %v150
    %v183 = vpack.c.b16 %v159, %v151
    %v184 = vpack.c.b16 %v168, %v160
    %v185 = vpack.c.b16 %v169, %v161
    %v186 = vpack.c.b16 %v170, %v162
    %v187 = vpack.c.b16 %v171, %v163
    %v188 = vpack.c.b16 %v172, %v164
    %v189 = vpack.c.b16 %v173, %v165
    %v190 = vpack.c.b16 %v174, %v166
    %v191 = vpack.c.b16 %v175, %v167
    %vm208 = vcmask 261120
    %v210 = vsel %vm208, %v69, 0
    %212 = vmatprep.subr.bf16.mxu0 %v177
    %213 = vmatpush1.bf16.msra.mxu0 %v176
    %214 = vmatprep.subr.bf16.mxu0 %v185
    %215 = vmatpush1.bf16.msra.mxu0 %v184
    %216 = vmatprep.subr.bf16.mxu0 0
    %217 = vmatpush1.bf16.msra.mxu0 0
    %218 = vmatprep.subr.bf16.mxu0 0
    %219 = vmatpush1.bf16.msra.mxu0 0
    %220 = vmatprep.subr.bf16.mxu0 0
    %221 = vmatpush1.bf16.msra.mxu0 0
    %222 = vmatprep.subr.bf16.mxu0 0
    %223 = vmatpush1.bf16.msra.mxu0 0
    %224 = vmatprep.subr.bf16.mxu0 0
    %225 = vmatpush1.bf16.msra.mxu0 0
    %226 = vmatprep.subr.bf16.mxu0 0
    %227 = vmatpush1.bf16.msra.mxu0 0
    %228 = vmatprep.subr.bf16.mxu0 0
    %229 = vmatpush1.bf16.msra.mxu0 0
    %230 = vmatprep.subr.bf16.mxu0 0
    %231 = vmatpush1.bf16.msra.mxu0 0
    %232 = vmatprep.subr.bf16.mxu0 0
    %233 = vmatpush1.bf16.msra.mxu0 0
    %234 = vmatprep.subr.bf16.mxu0 0
    %235 = vmatpush1.bf16.msra.mxu0 0
    %236 = vmatprep.subr.bf16.mxu0 0
    %237 = vmatpush1.bf16.msra.mxu0 0
    %238 = vmatprep.subr.bf16.mxu0 0
    %239 = vmatpush1.bf16.msra.mxu0 0
    %240 = vmatprep.subr.bf16.mxu0 0
    %241 = vmatpush1.bf16.msra.mxu0 0
    %242 = vmatprep.subr.bf16.mxu0 0
    %243 = vmatpush1.bf16.msra.mxu0 0
    %244 = vmatprep.mubr.bf16.mxu0 0
    %245 = vmatmul.mubr.bf16.gmra.mrb[0].mxu0 %v210
    %v246 = vpop.f32.mrb[0].mxu0
    %v247 = vadd.f32 %v91, %v246
    %v248 = vpop.f32.mrb[0].mxu0
    %v249 = vadd.f32 %v95, %v248
    %v250 = vpop.f32.mrb[0].mxu0
    %v251 = vpop.f32.mrb[0].mxu0
    %252 = vdwg.mxu0
    %253 = vmatprep.subr.bf16.mxu0 %v179
    %254 = vmatpush1.bf16.msra.mxu0 %v178
    %255 = vmatprep.subr.bf16.mxu0 %v187
    %256 = vmatpush1.bf16.msra.mxu0 %v186
    %257 = vmatprep.subr.bf16.mxu0 0
    %258 = vmatpush1.bf16.msra.mxu0 0
    %259 = vmatprep.subr.bf16.mxu0 0
    %260 = vmatpush1.bf16.msra.mxu0 0
    %261 = vmatprep.subr.bf16.mxu0 0
    %262 = vmatpush1.bf16.msra.mxu0 0
    %263 = vmatprep.subr.bf16.mxu0 0
    %264 = vmatpush1.bf16.msra.mxu0 0
    %265 = vmatprep.subr.bf16.mxu0 0
    %266 = vmatpush1.bf16.msra.mxu0 0
    %267 = vmatprep.subr.bf16.mxu0 0
    %268 = vmatpush1.bf16.msra.mxu0 0
    %269 = vmatprep.subr.bf16.mxu0 0
    %270 = vmatpush1.bf16.msra.mxu0 0
    %271 = vmatprep.subr.bf16.mxu0 0
    %272 = vmatpush1.bf16.msra.mxu0 0
    %273 = vmatprep.subr.bf16.mxu0 0
    %274 = vmatpush1.bf16.msra.mxu0 0
    %275 = vmatprep.subr.bf16.mxu0 0
    %276 = vmatpush1.bf16.msra.mxu0 0
    %277 = vmatprep.subr.bf16.mxu0 0
    %278 = vmatpush1.bf16.msra.mxu0 0
    %279 = vmatprep.subr.bf16.mxu0 0
    %280 = vmatpush1.bf16.msra.mxu0 0
    %281 = vmatprep.subr.bf16.mxu0 0
    %282 = vmatpush1.bf16.msra.mxu0 0
    %283 = vmatprep.subr.bf16.mxu0 0
    %284 = vmatpush1.bf16.msra.mxu0 0
    %285 = vmatprep.mubr.bf16.mxu0 0
    %286 = vmatmul.mubr.bf16.gmra.mrb[0].mxu0 %v210
    %v287 = vpop.f32.mrb[0].mxu0
    %v288 = vadd.f32 %v99, %v287
    %v289 = vpop.f32.mrb[0].mxu0
    %v290 = vadd.f32 %v103, %v289
    %v291 = vpop.f32.mrb[0].mxu0
    %v292 = vpop.f32.mrb[0].mxu0
    %293 = vdwg.mxu0
    %294 = vmatprep.subr.bf16.mxu0 %v181
    %295 = vmatpush1.bf16.msra.mxu0 %v180
    %296 = vmatprep.subr.bf16.mxu0 %v189
    %297 = vmatpush1.bf16.msra.mxu0 %v188
    %298 = vmatprep.subr.bf16.mxu0 0
    %299 = vmatpush1.bf16.msra.mxu0 0
    %300 = vmatprep.subr.bf16.mxu0 0
    %301 = vmatpush1.bf16.msra.mxu0 0
    %302 = vmatprep.subr.bf16.mxu0 0
    %303 = vmatpush1.bf16.msra.mxu0 0
    %304 = vmatprep.subr.bf16.mxu0 0
    %305 = vmatpush1.bf16.msra.mxu0 0
    %306 = vmatprep.subr.bf16.mxu0 0
    %307 = vmatpush1.bf16.msra.mxu0 0
    %308 = vmatprep.subr.bf16.mxu0 0
    %309 = vmatpush1.bf16.msra.mxu0 0
    %310 = vmatprep.subr.bf16.mxu0 0
    %311 = vmatpush1.bf16.msra.mxu0 0
    %312 = vmatprep.subr.bf16.mxu0 0
    %313 = vmatpush1.bf16.msra.mxu0 0
    %314 = vmatprep.subr.bf16.mxu0 0
    %315 = vmatpush1.bf16.msra.mxu0 0
    %316 = vmatprep.subr.bf16.mxu0 0
    %317 = vmatpush1.bf16.msra.mxu0 0
    %318 = vmatprep.subr.bf16.mxu0 0
    %319 = vmatpush1.bf16.msra.mxu0 0
    %320 = vmatprep.subr.bf16.mxu0 0
    %321 = vmatpush1.bf16.msra.mxu0 0
    %322 = vmatprep.subr.bf16.mxu0 0
    %323 = vmatpush1.bf16.msra.mxu0 0
    %324 = vmatprep.subr.bf16.mxu0 0
    %325 = vmatpush1.bf16.msra.mxu0 0
    %326 = vmatprep.mubr.bf16.mxu0 0
    %327 = vmatmul.mubr.bf16.gmra.mrb[0].mxu0 %v210
    %v328 = vpop.f32.mrb[0].mxu0
    %v329 = vadd.f32 %v107, %v328
    %v330 = vpop.f32.mrb[0].mxu0
    %v331 = vadd.f32 %v111, %v330
    %v332 = vpop.f32.mrb[0].mxu0
    %v333 = vpop.f32.mrb[0].mxu0
    %334 = vdwg.mxu0
    %335 = vmatprep.subr.bf16.mxu0 %v183
    %336 = vmatpush1.bf16.msra.mxu0 %v182
    %337 = vmatprep.subr.bf16.mxu0 %v191
    %338 = vmatpush1.bf16.msra.mxu0 %v190
    %339 = vmatprep.subr.bf16.mxu0 0
    %340 = vmatpush1.bf16.msra.mxu0 0
    %341 = vmatprep.subr.bf16.mxu0 0
    %342 = vmatpush1.bf16.msra.mxu0 0
    %343 = vmatprep.subr.bf16.mxu0 0
    %344 = vmatpush1.bf16.msra.mxu0 0
    %345 = vmatprep.subr.bf16.mxu0 0
    %346 = vmatpush1.bf16.msra.mxu0 0
    %347 = vmatprep.subr.bf16.mxu0 0
    %348 = vmatpush1.bf16.msra.mxu0 0
    %349 = vmatprep.subr.bf16.mxu0 0
    %350 = vmatpush1.bf16.msra.mxu0 0
    %351 = vmatprep.subr.bf16.mxu0 0
    %352 = vmatpush1.bf16.msra.mxu0 0
    %353 = vmatprep.subr.bf16.mxu0 0
    %354 = vmatpush1.bf16.msra.mxu0 0
    %355 = vmatprep.subr.bf16.mxu0 0
    %356 = vmatpush1.bf16.msra.mxu0 0
    %357 = vmatprep.subr.bf16.mxu0 0
    %358 = vmatpush1.bf16.msra.mxu0 0
    %359 = vmatprep.subr.bf16.mxu0 0
    %360 = vmatpush1.bf16.msra.mxu0 0
    %361 = vmatprep.subr.bf16.mxu0 0
    %362 = vmatpush1.bf16.msra.mxu0 0
    %363 = vmatprep.subr.bf16.mxu0 0
    %364 = vmatpush1.bf16.msra.mxu0 0
    %365 = vmatprep.subr.bf16.mxu0 0
    %366 = vmatpush1.bf16.msra.mxu0 0
    %367 = vmatprep.mubr.bf16.mxu0 0
    %368 = vmatmul.mubr.bf16.gmra.mrb[0].mxu0 %v210
    %v369 = vpop.f32.mrb[0].mxu0
    %v370 = vadd.f32 %v115, %v369
    %v371 = vpop.f32.mrb[0].mxu0
    %v372 = vadd.f32 %v119, %v371
    %v373 = vpop.f32.mrb[0].mxu0
    %v374 = vpop.f32.mrb[0].mxu0
    %375 = vdwg.mxu0
    %v376 = vmax.f32 %v247, 0.0
    %v377 = vmax.f32 %v249, 0.0
    %v378 = vmax.f32 %v288, 0.0
    %v379 = vmax.f32 %v290, 0.0
    %v380 = vmax.f32 %v329, 0.0
    %v381 = vmax.f32 %v331, 0.0
    %v382 = vmax.f32 %v370, 0.0
    %v383 = vmax.f32 %v372, 0.0
    %v384 = vpack.c.bf16 %v376, %v376
    %v385 = vpack.c.bf16 %v377, %v377
    %v386 = vpack.c.bf16 %v378, %v378
    %v387 = vpack.c.bf16 %v379, %v379
    %v388 = vpack.c.bf16 %v380, %v380
    %v389 = vpack.c.bf16 %v381, %v381
    %v390 = vpack.c.bf16 %v382, %v382
    %v391 = vpack.c.bf16 %v383, %v383
    %v392 = vld [vmem:[#allocation7] sm:$0xff]
    %v393 = vld [vmem:[#allocation7 + $0x8] sm:$0xff]
    %v394 = vld [vmem:[#allocation7 + $0x10] sm:$0xff]
    %v395 = vld [vmem:[#allocation7 + $0x18] sm:$0xff]
    %v396 = vld [vmem:[#allocation7 + $0x20] sm:$0xff]
    %v397 = vld [vmem:[#allocation7 + $0x28] sm:$0xff]
    %v398 = vld [vmem:[#allocation7 + $0x30] sm:$0xff]
    %v399 = vld [vmem:[#allocation7 + $0x38] sm:$0xff]
    %v400 = vld [vmem:[#allocation7 + $0x40] sm:$0xff]
    %v401 = vld [vmem:[#allocation7 + $0x48] sm:$0xff]
    %v402 = vld [vmem:[#allocation7 + $0x50] sm:$0xff]
    %v403 = vld [vmem:[#allocation7 + $0x58] sm:$0xff]
    %v404 = vld [vmem:[#allocation7 + $0x60] sm:$0xff]
    %v405 = vld [vmem:[#allocation7 + $0x68] sm:$0xff]
    %v406 = vld [vmem:[#allocation7 + $0x70] sm:$0xff]
    %v407 = vld [vmem:[#allocation7 + $0x78] sm:$0xff]
    %v408 = vld [vmem:[#allocation7 + $0x80] sm:$0xff]
    %v409 = vld [vmem:[#allocation7 + $0x88] sm:$0xff]
    %v410 = vld [vmem:[#allocation7 + $0x90] sm:$0xff]
    %v411 = vld [vmem:[#allocation7 + $0x98] sm:$0xff]
    %v412 = vld [vmem:[#allocation7 + $0xa0] sm:$0xff]
    %v413 = vld [vmem:[#allocation7 + $0xa8] sm:$0xff]
    %v414 = vld [vmem:[#allocation7 + $0xb0] sm:$0xff]
    %v415 = vld [vmem:[#allocation7 + $0xb8] sm:$0xff]
    %v416 = vld [vmem:[#allocation7 + $0xc0] sm:$0xff]
    %v417 = vld [vmem:[#allocation7 + $0xc8] sm:$0xff]
    %v418 = vld [vmem:[#allocation7 + $0xd0] sm:$0xff]
    %v419 = vld [vmem:[#allocation7 + $0xd8] sm:$0xff]
    %v420 = vld [vmem:[#allocation7 + $0xe0] sm:$0xff]
    %v421 = vld [vmem:[#allocation7 + $0xe8] sm:$0xff]
    %v422 = vld [vmem:[#allocation7 + $0xf0] sm:$0xff]
    %v423 = vld [vmem:[#allocation7 + $0xf8] sm:$0xff]
    %v424 = vld [vmem:[#allocation7 + $0x100] sm:$0xff]
    %v425 = vld [vmem:[#allocation7 + $0x108] sm:$0xff]
    %v426 = vld [vmem:[#allocation7 + $0x110] sm:$0xff]
    %v427 = vld [vmem:[#allocation7 + $0x118] sm:$0xff]
    %v428 = vld [vmem:[#allocation7 + $0x120] sm:$0xff]
    %v429 = vld [vmem:[#allocation7 + $0x128] sm:$0xff]
    %v430 = vld [vmem:[#allocation7 + $0x130] sm:$0xff]
    %v431 = vld [vmem:[#allocation7 + $0x138] sm:$0xff]
    %v432 = vld [vmem:[#allocation7 + $0x140] sm:$0xff]
    %v433 = vld [vmem:[#allocation7 + $0x148] sm:$0xff]
    %v434 = vld [vmem:[#allocation7 + $0x150] sm:$0xff]
    %v435 = vld [vmem:[#allocation7 + $0x158] sm:$0xff]
    %v436 = vld [vmem:[#allocation7 + $0x160] sm:$0xff]
    %v437 = vld [vmem:[#allocation7 + $0x168] sm:$0xff]
    %v438 = vld [vmem:[#allocation7 + $0x170] sm:$0xff]
    %v439 = vld [vmem:[#allocation7 + $0x178] sm:$0xff]
    %v440 = vld [vmem:[#allocation7 + $0x180] sm:$0xff]
    %v441 = vld [vmem:[#allocation7 + $0x188] sm:$0xff]
    %v442 = vld [vmem:[#allocation7 + $0x190] sm:$0xff]
    %v443 = vld [vmem:[#allocation7 + $0x198] sm:$0xff]
    %v444 = vld [vmem:[#allocation7 + $0x1a0] sm:$0xff]
    %v445 = vld [vmem:[#allocation7 + $0x1a8] sm:$0xff]
    %v446 = vld [vmem:[#allocation7 + $0x1b0] sm:$0xff]
    %v447 = vld [vmem:[#allocation7 + $0x1b8] sm:$0xff]
    %v448 = vld [vmem:[#allocation7 + $0x1c0] sm:$0xff]
    %v449 = vld [vmem:[#allocation7 + $0x1c8] sm:$0xff]
    %v450 = vld [vmem:[#allocation7 + $0x1d0] sm:$0xff]
    %v451 = vld [vmem:[#allocation7 + $0x1d8] sm:$0xff]
    %v452 = vld [vmem:[#allocation7 + $0x1e0] sm:$0xff]
    %v453 = vld [vmem:[#allocation7 + $0x1e8] sm:$0xff]
    %v454 = vld [vmem:[#allocation7 + $0x1f0] sm:$0xff]
    %v455 = vld [vmem:[#allocation7 + $0x1f8] sm:$0xff]
    %v456 = vld [vmem:[#allocation7 + $0x200] sm:$0xff]
    %v457 = vld [vmem:[#allocation7 + $0x208] sm:$0xff]
    %v458 = vld [vmem:[#allocation7 + $0x210] sm:$0xff]
    %v459 = vld [vmem:[#allocation7 + $0x218] sm:$0xff]
    %v460 = vld [vmem:[#allocation7 + $0x220] sm:$0xff]
    %v461 = vld [vmem:[#allocation7 + $0x228] sm:$0xff]
    %v462 = vld [vmem:[#allocation7 + $0x230] sm:$0xff]
    %v463 = vld [vmem:[#allocation7 + $0x238] sm:$0xff]
    %v464 = vld [vmem:[#allocation7 + $0x240] sm:$0xff]
    %v465 = vld [vmem:[#allocation7 + $0x248] sm:$0xff]
    %v466 = vld [vmem:[#allocation7 + $0x250] sm:$0xff]
    %v467 = vld [vmem:[#allocation7 + $0x258] sm:$0xff]
    %v468 = vld [vmem:[#allocation7 + $0x260] sm:$0xff]
    %v469 = vld [vmem:[#allocation7 + $0x268] sm:$0xff]
    %v470 = vld [vmem:[#allocation7 + $0x270] sm:$0xff]
    %v471 = vld [vmem:[#allocation7 + $0x278] sm:$0xff]
    %v472 = vld [vmem:[#allocation7 + $0x280] sm:$0xff]
    %v473 = vld [vmem:[#allocation7 + $0x288] sm:$0xff]
    %v474 = vld [vmem:[#allocation7 + $0x290] sm:$0xff]
    %v475 = vld [vmem:[#allocation7 + $0x298] sm:$0xff]
    %v476 = vld [vmem:[#allocation7 + $0x2a0] sm:$0xff]
    %v477 = vld [vmem:[#allocation7 + $0x2a8] sm:$0xff]
    %v478 = vld [vmem:[#allocation7 + $0x2b0] sm:$0xff]
    %v479 = vld [vmem:[#allocation7 + $0x2b8] sm:$0xff]
    %v480 = vld [vmem:[#allocation7 + $0x2c0] sm:$0xff]
    %v481 = vld [vmem:[#allocation7 + $0x2c8] sm:$0xff]
    %v482 = vld [vmem:[#allocation7 + $0x2d0] sm:$0xff]
    %v483 = vld [vmem:[#allocation7 + $0x2d8] sm:$0xff]
    %v484 = vld [vmem:[#allocation7 + $0x2e0] sm:$0xff]
    %v485 = vld [vmem:[#allocation7 + $0x2e8] sm:$0xff]
    %v486 = vld [vmem:[#allocation7 + $0x2f0] sm:$0xff]
    %v487 = vld [vmem:[#allocation7 + $0x2f8] sm:$0xff]
    %v488 = vld [vmem:[#allocation7 + $0x300] sm:$0xff]
    %v489 = vld [vmem:[#allocation7 + $0x308] sm:$0xff]
    %v490 = vld [vmem:[#allocation7 + $0x310] sm:$0xff]
    %v491 = vld [vmem:[#allocation7 + $0x318] sm:$0xff]
    %v492 = vld [vmem:[#allocation7 + $0x320] sm:$0xff]
    %v493 = vld [vmem:[#allocation7 + $0x328] sm:$0xff]
    %v494 = vld [vmem:[#allocation7 + $0x330] sm:$0xff]
    %v495 = vld [vmem:[#allocation7 + $0x338] sm:$0xff]
    %v496 = vld [vmem:[#allocation7 + $0x340] sm:$0xff]
    %v497 = vld [vmem:[#allocation7 + $0x348] sm:$0xff]
    %v498 = vld [vmem:[#allocation7 + $0x350] sm:$0xff]
    %v499 = vld [vmem:[#allocation7 + $0x358] sm:$0xff]
    %v500 = vld [vmem:[#allocation7 + $0x360] sm:$0xff]
    %v501 = vld [vmem:[#allocation7 + $0x368] sm:$0xff]
    %v502 = vld [vmem:[#allocation7 + $0x370] sm:$0xff]
    %v503 = vld [vmem:[#allocation7 + $0x378] sm:$0xff]
    %v504 = vld [vmem:[#allocation7 + $0x380] sm:$0xff]
    %v505 = vld [vmem:[#allocation7 + $0x388] sm:$0xff]
    %v506 = vld [vmem:[#allocation7 + $0x390] sm:$0xff]
    %v507 = vld [vmem:[#allocation7 + $0x398] sm:$0xff]
    %v508 = vld [vmem:[#allocation7 + $0x3a0] sm:$0xff]
    %v509 = vld [vmem:[#allocation7 + $0x3a8] sm:$0xff]
    %v510 = vld [vmem:[#allocation7 + $0x3b0] sm:$0xff]
    %v511 = vld [vmem:[#allocation7 + $0x3b8] sm:$0xff]
    %v512 = vld [vmem:[#allocation7 + $0x3c0] sm:$0xff]
    %v513 = vld [vmem:[#allocation7 + $0x3c8] sm:$0xff]
    %v514 = vld [vmem:[#allocation7 + $0x3d0] sm:$0xff]
    %v515 = vld [vmem:[#allocation7 + $0x3d8] sm:$0xff]
    %v516 = vld [vmem:[#allocation7 + $0x3e0] sm:$0xff]
    %v517 = vld [vmem:[#allocation7 + $0x3e8] sm:$0xff]
    %v518 = vld [vmem:[#allocation7 + $0x3f0] sm:$0xff]
    %v519 = vld [vmem:[#allocation7 + $0x3f8] sm:$0xff]
    %v520 = vld [vmem:[#allocation7 + $0x400] sm:$0xff]
    %v521 = vld [vmem:[#allocation7 + $0x408] sm:$0xff]
    %v522 = vld [vmem:[#allocation7 + $0x410] sm:$0xff]
    %v523 = vld [vmem:[#allocation7 + $0x418] sm:$0xff]
    %v524 = vld [vmem:[#allocation7 + $0x420] sm:$0xff]
    %v525 = vld [vmem:[#allocation7 + $0x428] sm:$0xff]
    %v526 = vld [vmem:[#allocation7 + $0x430] sm:$0xff]
    %v527 = vld [vmem:[#allocation7 + $0x438] sm:$0xff]
    %v528 = vld [vmem:[#allocation7 + $0x440] sm:$0xff]
    %v529 = vld [vmem:[#allocation7 + $0x448] sm:$0xff]
    %v530 = vld [vmem:[#allocation7 + $0x450] sm:$0xff]
    %v531 = vld [vmem:[#allocation7 + $0x458] sm:$0xff]
    %v532 = vld [vmem:[#allocation7 + $0x460] sm:$0xff]
    %v533 = vld [vmem:[#allocation7 + $0x468] sm:$0xff]
    %v534 = vld [vmem:[#allocation7 + $0x470] sm:$0xff]
    %v535 = vld [vmem:[#allocation7 + $0x478] sm:$0xff]
    %v536 = vld [vmem:[#allocation7 + $0x480] sm:$0xff]
    %v537 = vld [vmem:[#allocation7 + $0x488] sm:$0xff]
    %v538 = vld [vmem:[#allocation7 + $0x490] sm:$0xff]
    %v539 = vld [vmem:[#allocation7 + $0x498] sm:$0xff]
    %v540 = vld [vmem:[#allocation7 + $0x4a0] sm:$0xff]
    %v541 = vld [vmem:[#allocation7 + $0x4a8] sm:$0xff]
    %v542 = vld [vmem:[#allocation7 + $0x4b0] sm:$0xff]
    %v543 = vld [vmem:[#allocation7 + $0x4b8] sm:$0xff]
    %v544 = vld [vmem:[#allocation7 + $0x4c0] sm:$0xff]
    %v545 = vld [vmem:[#allocation7 + $0x4c8] sm:$0xff]
    %v546 = vld [vmem:[#allocation7 + $0x4d0] sm:$0xff]
    %v547 = vld [vmem:[#allocation7 + $0x4d8] sm:$0xff]
    %v548 = vld [vmem:[#allocation7 + $0x4e0] sm:$0xff]
    %v549 = vld [vmem:[#allocation7 + $0x4e8] sm:$0xff]
    %v550 = vld [vmem:[#allocation7 + $0x4f0] sm:$0xff]
    %v551 = vld [vmem:[#allocation7 + $0x4f8] sm:$0xff]
    %v552 = vld [vmem:[#allocation7 + $0x500] sm:$0xff]
    %v553 = vld [vmem:[#allocation7 + $0x508] sm:$0xff]
    %v554 = vld [vmem:[#allocation7 + $0x510] sm:$0xff]
    %v555 = vld [vmem:[#allocation7 + $0x518] sm:$0xff]
    %v556 = vld [vmem:[#allocation7 + $0x520] sm:$0xff]
    %v557 = vld [vmem:[#allocation7 + $0x528] sm:$0xff]
    %v558 = vld [vmem:[#allocation7 + $0x530] sm:$0xff]
    %v559 = vld [vmem:[#allocation7 + $0x538] sm:$0xff]
    %v560 = vld [vmem:[#allocation7 + $0x540] sm:$0xff]
    %v561 = vld [vmem:[#allocation7 + $0x548] sm:$0xff]
    %v562 = vld [vmem:[#allocation7 + $0x550] sm:$0xff]
    %v563 = vld [vmem:[#allocation7 + $0x558] sm:$0xff]
    %v564 = vld [vmem:[#allocation7 + $0x560] sm:$0xff]
    %v565 = vld [vmem:[#allocation7 + $0x568] sm:$0xff]
    %v566 = vld [vmem:[#allocation7 + $0x570] sm:$0xff]
    %v567 = vld [vmem:[#allocation7 + $0x578] sm:$0xff]
    %v568 = vld [vmem:[#allocation7 + $0x580] sm:$0xff]
    %v569 = vld [vmem:[#allocation7 + $0x588] sm:$0xff]
    %v570 = vld [vmem:[#allocation7 + $0x590] sm:$0xff]
    %v571 = vld [vmem:[#allocation7 + $0x598] sm:$0xff]
    %v572 = vld [vmem:[#allocation7 + $0x5a0] sm:$0xff]
    %v573 = vld [vmem:[#allocation7 + $0x5a8] sm:$0xff]
    %v574 = vld [vmem:[#allocation7 + $0x5b0] sm:$0xff]
    %v575 = vld [vmem:[#allocation7 + $0x5b8] sm:$0xff]
    %v576 = vld [vmem:[#allocation7 + $0x5c0] sm:$0xff]
    %v577 = vld [vmem:[#allocation7 + $0x5c8] sm:$0xff]
    %v578 = vld [vmem:[#allocation7 + $0x5d0] sm:$0xff]
    %v579 = vld [vmem:[#allocation7 + $0x5d8] sm:$0xff]
    %v580 = vld [vmem:[#allocation7 + $0x5e0] sm:$0xff]
    %v581 = vld [vmem:[#allocation7 + $0x5e8] sm:$0xff]
    %v582 = vld [vmem:[#allocation7 + $0x5f0] sm:$0xff]
    %v583 = vld [vmem:[#allocation7 + $0x5f8] sm:$0xff]
    %v584 = vld [vmem:[#allocation7 + $0x600] sm:$0xff]
    %v585 = vld [vmem:[#allocation7 + $0x608] sm:$0xff]
    %v586 = vld [vmem:[#allocation7 + $0x610] sm:$0xff]
    %v587 = vld [vmem:[#allocation7 + $0x618] sm:$0xff]
    %v588 = vld [vmem:[#allocation7 + $0x620] sm:$0xff]
    %v589 = vld [vmem:[#allocation7 + $0x628] sm:$0xff]
    %v590 = vld [vmem:[#allocation7 + $0x630] sm:$0xff]
    %v591 = vld [vmem:[#allocation7 + $0x638] sm:$0xff]
    %v592 = vld [vmem:[#allocation7 + $0x640] sm:$0xff]
    %v593 = vld [vmem:[#allocation7 + $0x648] sm:$0xff]
    %v594 = vld [vmem:[#allocation7 + $0x650] sm:$0xff]
    %v595 = vld [vmem:[#allocation7 + $0x658] sm:$0xff]
    %v596 = vld [vmem:[#allocation7 + $0x660] sm:$0xff]
    %v597 = vld [vmem:[#allocation7 + $0x668] sm:$0xff]
    %v598 = vld [vmem:[#allocation7 + $0x670] sm:$0xff]
    %v599 = vld [vmem:[#allocation7 + $0x678] sm:$0xff]
    %v600 = vld [vmem:[#allocation7 + $0x680] sm:$0xff]
    %v601 = vld [vmem:[#allocation7 + $0x688] sm:$0xff]
    %v602 = vld [vmem:[#allocation7 + $0x690] sm:$0xff]
    %v603 = vld [vmem:[#allocation7 + $0x698] sm:$0xff]
    %v604 = vld [vmem:[#allocation7 + $0x6a0] sm:$0xff]
    %v605 = vld [vmem:[#allocation7 + $0x6a8] sm:$0xff]
    %v606 = vld [vmem:[#allocation7 + $0x6b0] sm:$0xff]
    %v607 = vld [vmem:[#allocation7 + $0x6b8] sm:$0xff]
    %v608 = vld [vmem:[#allocation7 + $0x6c0] sm:$0xff]
    %v609 = vld [vmem:[#allocation7 + $0x6c8] sm:$0xff]
    %v610 = vld [vmem:[#allocation7 + $0x6d0] sm:$0xff]
    %v611 = vld [vmem:[#allocation7 + $0x6d8] sm:$0xff]
    %v612 = vld [vmem:[#allocation7 + $0x6e0] sm:$0xff]
    %v613 = vld [vmem:[#allocation7 + $0x6e8] sm:$0xff]
    %v614 = vld [vmem:[#allocation7 + $0x6f0] sm:$0xff]
    %v615 = vld [vmem:[#allocation7 + $0x6f8] sm:$0xff]
    %v616 = vld [vmem:[#allocation7 + $0x700] sm:$0xff]
    %v617 = vld [vmem:[#allocation7 + $0x708] sm:$0xff]
    %v618 = vld [vmem:[#allocation7 + $0x710] sm:$0xff]
    %v619 = vld [vmem:[#allocation7 + $0x718] sm:$0xff]
    %v620 = vld [vmem:[#allocation7 + $0x720] sm:$0xff]
    %v621 = vld [vmem:[#allocation7 + $0x728] sm:$0xff]
    %v622 = vld [vmem:[#allocation7 + $0x730] sm:$0xff]
    %v623 = vld [vmem:[#allocation7 + $0x738] sm:$0xff]
    %v624 = vld [vmem:[#allocation7 + $0x740] sm:$0xff]
    %v625 = vld [vmem:[#allocation7 + $0x748] sm:$0xff]
    %v626 = vld [vmem:[#allocation7 + $0x750] sm:$0xff]
    %v627 = vld [vmem:[#allocation7 + $0x758] sm:$0xff]
    %v628 = vld [vmem:[#allocation7 + $0x760] sm:$0xff]
    %v629 = vld [vmem:[#allocation7 + $0x768] sm:$0xff]
    %v630 = vld [vmem:[#allocation7 + $0x770] sm:$0xff]
    %v631 = vld [vmem:[#allocation7 + $0x778] sm:$0xff]
    %v632 = vld [vmem:[#allocation7 + $0x780] sm:$0xff]
    %v633 = vld [vmem:[#allocation7 + $0x788] sm:$0xff]
    %v634 = vld [vmem:[#allocation7 + $0x790] sm:$0xff]
    %v635 = vld [vmem:[#allocation7 + $0x798] sm:$0xff]
    %v636 = vld [vmem:[#allocation7 + $0x7a0] sm:$0xff]
    %v637 = vld [vmem:[#allocation7 + $0x7a8] sm:$0xff]
    %v638 = vld [vmem:[#allocation7 + $0x7b0] sm:$0xff]
    %v639 = vld [vmem:[#allocation7 + $0x7b8] sm:$0xff]
    %v640 = vld [vmem:[#allocation7 + $0x7c0] sm:$0xff]
    %v641 = vld [vmem:[#allocation7 + $0x7c8] sm:$0xff]
    %v642 = vld [vmem:[#allocation7 + $0x7d0] sm:$0xff]
    %v643 = vld [vmem:[#allocation7 + $0x7d8] sm:$0xff]
    %v644 = vld [vmem:[#allocation7 + $0x7e0] sm:$0xff]
    %v645 = vld [vmem:[#allocation7 + $0x7e8] sm:$0xff]
    %v646 = vld [vmem:[#allocation7 + $0x7f0] sm:$0xff]
    %v647 = vld [vmem:[#allocation7 + $0x7f8] sm:$0xff]
    %v648 = vld [vmem:[%s4] sm:$0xf]
    %v650 = vlaneseq
    %v651 = vshrl.u32 %v650, 7
    %v652 = vsub.s32 0, %v651
    %v653 = vrot.slane %v648, %v652
    %v654 = vlaneseq
    %v655 = vshrl.u32 %v654, 7
    %v656 = vsub.s32 1, %v655
    %v657 = vrot.slane %v648, %v656
    %v658 = vlaneseq
    %v659 = vshrl.u32 %v658, 7
    %v660 = vsub.s32 2, %v659
    %v661 = vrot.slane %v648, %v660
    %v662 = vlaneseq
    %v663 = vshrl.u32 %v662, 7
    %v664 = vsub.s32 3, %v663
    %v665 = vrot.slane %v648, %v664
    %v926 = vunpack.c.l.b16 %v392
    %v927 = vunpack.c.h.b16 %v392
    %v928 = vunpack.c.l.b16 %v393
    %v929 = vunpack.c.h.b16 %v393
    %v930 = vunpack.c.l.b16 %v394
    %v931 = vunpack.c.h.b16 %v394
    %v932 = vunpack.c.l.b16 %v395
    %v933 = vunpack.c.h.b16 %v395
    %v934 = vunpack.c.l.b16 %v396
    %v935 = vunpack.c.h.b16 %v396
    %v936 = vunpack.c.l.b16 %v397
    %v937 = vunpack.c.h.b16 %v397
    %v938 = vunpack.c.l.b16 %v398
    %v939 = vunpack.c.h.b16 %v398
    %v940 = vunpack.c.l.b16 %v399
    %v941 = vunpack.c.h.b16 %v399
    %v942 = vunpack.c.l.b16 %v400
    %v943 = vunpack.c.h.b16 %v400
    %v944 = vunpack.c.l.b16 %v401
    %v945 = vunpack.c.h.b16 %v401
    %v946 = vunpack.c.l.b16 %v402
    %v947 = vunpack.c.h.b16 %v402
    %v948 = vunpack.c.l.b16 %v403
    %v949 = vunpack.c.h.b16 %v403
    %v950 = vunpack.c.l.b16 %v404
    %v951 = vunpack.c.h.b16 %v404
    %v952 = vunpack.c.l.b16 %v405
    %v953 = vunpack.c.h.b16 %v405
    %v954 = vunpack.c.l.b16 %v406
    %v955 = vunpack.c.h.b16 %v406
    %v956 = vunpack.c.l.b16 %v407
    %v957 = vunpack.c.h.b16 %v407
    %v958 = vunpack.c.l.b16 %v408
    %v959 = vunpack.c.h.b16 %v408
    %v960 = vunpack.c.l.b16 %v409
    %v961 = vunpack.c.h.b16 %v409
    %v962 = vunpack.c.l.b16 %v410
    %v963 = vunpack.c.h.b16 %v410
    %v964 = vunpack.c.l.b16 %v411
    %v965 = vunpack.c.h.b16 %v411
    %v966 = vunpack.c.l.b16 %v412
    %v967 = vunpack.c.h.b16 %v412
    %v968 = vunpack.c.l.b16 %v413
    %v969 = vunpack.c.h.b16 %v413
    %v970 = vunpack.c.l.b16 %v414
    %v971 = vunpack.c.h.b16 %v414
    %v972 = vunpack.c.l.b16 %v415
    %v973 = vunpack.c.h.b16 %v415
    %v974 = vunpack.c.l.b16 %v416
    %v975 = vunpack.c.h.b16 %v416
    %v976 = vunpack.c.l.b16 %v417
    %v977 = vunpack.c.h.b16 %v417
    %v978 = vunpack.c.l.b16 %v418
    %v979 = vunpack.c.h.b16 %v418
    %v980 = vunpack.c.l.b16 %v419
    %v981 = vunpack.c.h.b16 %v419
    %v982 = vunpack.c.l.b16 %v420
    %v983 = vunpack.c.h.b16 %v420
    %v984 = vunpack.c.l.b16 %v421
    %v985 = vunpack.c.h.b16 %v421
    %v986 = vunpack.c.l.b16 %v422
    %v987 = vunpack.c.h.b16 %v422
    %v988 = vunpack.c.l.b16 %v423
    %v989 = vunpack.c.h.b16 %v423
    %v990 = vunpack.c.l.b16 %v424
    %v991 = vunpack.c.h.b16 %v424
    %v992 = vunpack.c.l.b16 %v425
    %v993 = vunpack.c.h.b16 %v425
    %v994 = vunpack.c.l.b16 %v426
    %v995 = vunpack.c.h.b16 %v426
    %v996 = vunpack.c.l.b16 %v427
    %v997 = vunpack.c.h.b16 %v427
    %v998 = vunpack.c.l.b16 %v428
    %v999 = vunpack.c.h.b16 %v428
    %v1000 = vunpack.c.l.b16 %v429
    %v1001 = vunpack.c.h.b16 %v429
    %v1002 = vunpack.c.l.b16 %v430
    %v1003 = vunpack.c.h.b16 %v430
    %v1004 = vunpack.c.l.b16 %v431
    %v1005 = vunpack.c.h.b16 %v431
    %v1006 = vunpack.c.l.b16 %v432
    %v1007 = vunpack.c.h.b16 %v432
    %v1008 = vunpack.c.l.b16 %v433
    %v1009 = vunpack.c.h.b16 %v433
    %v1010 = vunpack.c.l.b16 %v434
    %v1011 = vunpack.c.h.b16 %v434
    %v1012 = vunpack.c.l.b16 %v435
    %v1013 = vunpack.c.h.b16 %v435
    %v1014 = vunpack.c.l.b16 %v436
    %v1015 = vunpack.c.h.b16 %v436
    %v1016 = vunpack.c.l.b16 %v437
    %v1017 = vunpack.c.h.b16 %v437
    %v1018 = vunpack.c.l.b16 %v438
    %v1019 = vunpack.c.h.b16 %v438
    %v1020 = vunpack.c.l.b16 %v439
    %v1021 = vunpack.c.h.b16 %v439
    %v1022 = vunpack.c.l.b16 %v440
    %v1023 = vunpack.c.h.b16 %v440
    %v1024 = vunpack.c.l.b16 %v441
    %v1025 = vunpack.c.h.b16 %v441
    %v1026 = vunpack.c.l.b16 %v442
    %v1027 = vunpack.c.h.b16 %v442
    %v1028 = vunpack.c.l.b16 %v443
    %v1029 = vunpack.c.h.b16 %v443
    %v1030 = vunpack.c.l.b16 %v444
    %v1031 = vunpack.c.h.b16 %v444
    %v1032 = vunpack.c.l.b16 %v445
    %v1033 = vunpack.c.h.b16 %v445
    %v1034 = vunpack.c.l.b16 %v446
    %v1035 = vunpack.c.h.b16 %v446
    %v1036 = vunpack.c.l.b16 %v447
    %v1037 = vunpack.c.h.b16 %v447
    %v1038 = vunpack.c.l.b16 %v448
    %v1039 = vunpack.c.h.b16 %v448
    %v1040 = vunpack.c.l.b16 %v449
    %v1041 = vunpack.c.h.b16 %v449
    %v1042 = vunpack.c.l.b16 %v450
    %v1043 = vunpack.c.h.b16 %v450
    %v1044 = vunpack.c.l.b16 %v451
    %v1045 = vunpack.c.h.b16 %v451
    %v1046 = vunpack.c.l.b16 %v452
    %v1047 = vunpack.c.h.b16 %v452
    %v1048 = vunpack.c.l.b16 %v453
    %v1049 = vunpack.c.h.b16 %v453
    %v1050 = vunpack.c.l.b16 %v454
    %v1051 = vunpack.c.h.b16 %v454
    %v1052 = vunpack.c.l.b16 %v455
    %v1053 = vunpack.c.h.b16 %v455
    %v1054 = vunpack.c.l.b16 %v456
    %v1055 = vunpack.c.h.b16 %v456
    %v1056 = vunpack.c.l.b16 %v457
    %v1057 = vunpack.c.h.b16 %v457
    %v1058 = vunpack.c.l.b16 %v458
    %v1059 = vunpack.c.h.b16 %v458
    %v1060 = vunpack.c.l.b16 %v459
    %v1061 = vunpack.c.h.b16 %v459
    %v1062 = vunpack.c.l.b16 %v460
    %v1063 = vunpack.c.h.b16 %v460
    %v1064 = vunpack.c.l.b16 %v461
    %v1065 = vunpack.c.h.b16 %v461
    %v1066 = vunpack.c.l.b16 %v462
    %v1067 = vunpack.c.h.b16 %v462
    %v1068 = vunpack.c.l.b16 %v463
    %v1069 = vunpack.c.h.b16 %v463
    %v1070 = vunpack.c.l.b16 %v464
    %v1071 = vunpack.c.h.b16 %v464
    %v1072 = vunpack.c.l.b16 %v465
    %v1073 = vunpack.c.h.b16 %v465
    %v1074 = vunpack.c.l.b16 %v466
    %v1075 = vunpack.c.h.b16 %v466
    %v1076 = vunpack.c.l.b16 %v467
    %v1077 = vunpack.c.h.b16 %v467
    %v1078 = vunpack.c.l.b16 %v468
    %v1079 = vunpack.c.h.b16 %v468
    %v1080 = vunpack.c.l.b16 %v469
    %v1081 = vunpack.c.h.b16 %v469
    %v1082 = vunpack.c.l.b16 %v470
    %v1083 = vunpack.c.h.b16 %v470
    %v1084 = vunpack.c.l.b16 %v471
    %v1085 = vunpack.c.h.b16 %v471
    %v1086 = vunpack.c.l.b16 %v472
    %v1087 = vunpack.c.h.b16 %v472
    %v1088 = vunpack.c.l.b16 %v473
    %v1089 = vunpack.c.h.b16 %v473
    %v1090 = vunpack.c.l.b16 %v474
    %v1091 = vunpack.c.h.b16 %v474
    %v1092 = vunpack.c.l.b16 %v475
    %v1093 = vunpack.c.h.b16 %v475
    %v1094 = vunpack.c.l.b16 %v476
    %v1095 = vunpack.c.h.b16 %v476
    %v1096 = vunpack.c.l.b16 %v477
    %v1097 = vunpack.c.h.b16 %v477
    %v1098 = vunpack.c.l.b16 %v478
    %v1099 = vunpack.c.h.b16 %v478
    %v1100 = vunpack.c.l.b16 %v479
    %v1101 = vunpack.c.h.b16 %v479
    %v1102 = vunpack.c.l.b16 %v480
    %v1103 = vunpack.c.h.b16 %v480
    %v1104 = vunpack.c.l.b16 %v481
    %v1105 = vunpack.c.h.b16 %v481
    %v1106 = vunpack.c.l.b16 %v482
    %v1107 = vunpack.c.h.b16 %v482
    %v1108 = vunpack.c.l.b16 %v483
    %v1109 = vunpack.c.h.b16 %v483
    %v1110 = vunpack.c.l.b16 %v484
    %v1111 = vunpack.c.h.b16 %v484
    %v1112 = vunpack.c.l.b16 %v485
    %v1113 = vunpack.c.h.b16 %v485
    %v1114 = vunpack.c.l.b16 %v486
    %v1115 = vunpack.c.h.b16 %v486
    %v1116 = vunpack.c.l.b16 %v487
    %v1117 = vunpack.c.h.b16 %v487
    %v1118 = vunpack.c.l.b16 %v488
    %v1119 = vunpack.c.h.b16 %v488
    %v1120 = vunpack.c.l.b16 %v489
    %v1121 = vunpack.c.h.b16 %v489
    %v1122 = vunpack.c.l.b16 %v490
    %v1123 = vunpack.c.h.b16 %v490
    %v1124 = vunpack.c.l.b16 %v491
    %v1125 = vunpack.c.h.b16 %v491
    %v1126 = vunpack.c.l.b16 %v492
    %v1127 = vunpack.c.h.b16 %v492
    %v1128 = vunpack.c.l.b16 %v493
    %v1129 = vunpack.c.h.b16 %v493
    %v1130 = vunpack.c.l.b16 %v494
    %v1131 = vunpack.c.h.b16 %v494
    %v1132 = vunpack.c.l.b16 %v495
    %v1133 = vunpack.c.h.b16 %v495
    %v1134 = vunpack.c.l.b16 %v496
    %v1135 = vunpack.c.h.b16 %v496
    %v1136 = vunpack.c.l.b16 %v497
    %v1137 = vunpack.c.h.b16 %v497
    %v1138 = vunpack.c.l.b16 %v498
    %v1139 = vunpack.c.h.b16 %v498
    %v1140 = vunpack.c.l.b16 %v499
    %v1141 = vunpack.c.h.b16 %v499
    %v1142 = vunpack.c.l.b16 %v500
    %v1143 = vunpack.c.h.b16 %v500
    %v1144 = vunpack.c.l.b16 %v501
    %v1145 = vunpack.c.h.b16 %v501
    %v1146 = vunpack.c.l.b16 %v502
    %v1147 = vunpack.c.h.b16 %v502
    %v1148 = vunpack.c.l.b16 %v503
    %v1149 = vunpack.c.h.b16 %v503
    %v1150 = vunpack.c.l.b16 %v504
    %v1151 = vunpack.c.h.b16 %v504
    %v1152 = vunpack.c.l.b16 %v505
    %v1153 = vunpack.c.h.b16 %v505
    %v1154 = vunpack.c.l.b16 %v506
    %v1155 = vunpack.c.h.b16 %v506
    %v1156 = vunpack.c.l.b16 %v507
    %v1157 = vunpack.c.h.b16 %v507
    %v1158 = vunpack.c.l.b16 %v508
    %v1159 = vunpack.c.h.b16 %v508
    %v1160 = vunpack.c.l.b16 %v509
    %v1161 = vunpack.c.h.b16 %v509
    %v1162 = vunpack.c.l.b16 %v510
    %v1163 = vunpack.c.h.b16 %v510
    %v1164 = vunpack.c.l.b16 %v511
    %v1165 = vunpack.c.h.b16 %v511
    %v1166 = vunpack.c.l.b16 %v512
    %v1167 = vunpack.c.h.b16 %v512
    %v1168 = vunpack.c.l.b16 %v513
    %v1169 = vunpack.c.h.b16 %v513
    %v1170 = vunpack.c.l.b16 %v514
    %v1171 = vunpack.c.h.b16 %v514
    %v1172 = vunpack.c.l.b16 %v515
    %v1173 = vunpack.c.h.b16 %v515
    %v1174 = vunpack.c.l.b16 %v516
    %v1175 = vunpack.c.h.b16 %v516
    %v1176 = vunpack.c.l.b16 %v517
    %v1177 = vunpack.c.h.b16 %v517
    %v1178 = vunpack.c.l.b16 %v518
    %v1179 = vunpack.c.h.b16 %v518
    %v1180 = vunpack.c.l.b16 %v519
    %v1181 = vunpack.c.h.b16 %v519
    %v1182 = vunpack.c.l.b16 %v520
    %v1183 = vunpack.c.h.b16 %v520
    %v1184 = vunpack.c.l.b16 %v521
    %v1185 = vunpack.c.h.b16 %v521
    %v1186 = vunpack.c.l.b16 %v522
    %v1187 = vunpack.c.h.b16 %v522
    %v1188 = vunpack.c.l.b16 %v523
    %v1189 = vunpack.c.h.b16 %v523
    %v1190 = vunpack.c.l.b16 %v524
    %v1191 = vunpack.c.h.b16 %v524
    %v1192 = vunpack.c.l.b16 %v525
    %v1193 = vunpack.c.h.b16 %v525
    %v1194 = vunpack.c.l.b16 %v526
    %v1195 = vunpack.c.h.b16 %v526
    %v1196 = vunpack.c.l.b16 %v527
    %v1197 = vunpack.c.h.b16 %v527
    %v1198 = vunpack.c.l.b16 %v528
    %v1199 = vunpack.c.h.b16 %v528
    %v1200 = vunpack.c.l.b16 %v529
    %v1201 = vunpack.c.h.b16 %v529
    %v1202 = vunpack.c.l.b16 %v530
    %v1203 = vunpack.c.h.b16 %v530
    %v1204 = vunpack.c.l.b16 %v531
    %v1205 = vunpack.c.h.b16 %v531
    %v1206 = vunpack.c.l.b16 %v532
    %v1207 = vunpack.c.h.b16 %v532
    %v1208 = vunpack.c.l.b16 %v533
    %v1209 = vunpack.c.h.b16 %v533
    %v1210 = vunpack.c.l.b16 %v534
    %v1211 = vunpack.c.h.b16 %v534
    %v1212 = vunpack.c.l.b16 %v535
    %v1213 = vunpack.c.h.b16 %v535
    %v1214 = vunpack.c.l.b16 %v536
    %v1215 = vunpack.c.h.b16 %v536
    %v1216 = vunpack.c.l.b16 %v537
    %v1217 = vunpack.c.h.b16 %v537
    %v1218 = vunpack.c.l.b16 %v538
    %v1219 = vunpack.c.h.b16 %v538
    %v1220 = vunpack.c.l.b16 %v539
    %v1221 = vunpack.c.h.b16 %v539
    %v1222 = vunpack.c.l.b16 %v540
    %v1223 = vunpack.c.h.b16 %v540
    %v1224 = vunpack.c.l.b16 %v541
    %v1225 = vunpack.c.h.b16 %v541
    %v1226 = vunpack.c.l.b16 %v542
    %v1227 = vunpack.c.h.b16 %v542
    %v1228 = vunpack.c.l.b16 %v543
    %v1229 = vunpack.c.h.b16 %v543
    %v1230 = vunpack.c.l.b16 %v544
    %v1231 = vunpack.c.h.b16 %v544
    %v1232 = vunpack.c.l.b16 %v545
    %v1233 = vunpack.c.h.b16 %v545
    %v1234 = vunpack.c.l.b16 %v546
    %v1235 = vunpack.c.h.b16 %v546
    %v1236 = vunpack.c.l.b16 %v547
    %v1237 = vunpack.c.h.b16 %v547
    %v1238 = vunpack.c.l.b16 %v548
    %v1239 = vunpack.c.h.b16 %v548
    %v1240 = vunpack.c.l.b16 %v549
    %v1241 = vunpack.c.h.b16 %v549
    %v1242 = vunpack.c.l.b16 %v550
    %v1243 = vunpack.c.h.b16 %v550
    %v1244 = vunpack.c.l.b16 %v551
    %v1245 = vunpack.c.h.b16 %v551
    %v1246 = vunpack.c.l.b16 %v552
    %v1247 = vunpack.c.h.b16 %v552
    %v1248 = vunpack.c.l.b16 %v553
    %v1249 = vunpack.c.h.b16 %v553
    %v1250 = vunpack.c.l.b16 %v554
    %v1251 = vunpack.c.h.b16 %v554
    %v1252 = vunpack.c.l.b16 %v555
    %v1253 = vunpack.c.h.b16 %v555
    %v1254 = vunpack.c.l.b16 %v556
    %v1255 = vunpack.c.h.b16 %v556
    %v1256 = vunpack.c.l.b16 %v557
    %v1257 = vunpack.c.h.b16 %v557
    %v1258 = vunpack.c.l.b16 %v558
    %v1259 = vunpack.c.h.b16 %v558
    %v1260 = vunpack.c.l.b16 %v559
    %v1261 = vunpack.c.h.b16 %v559
    %v1262 = vunpack.c.l.b16 %v560
    %v1263 = vunpack.c.h.b16 %v560
    %v1264 = vunpack.c.l.b16 %v561
    %v1265 = vunpack.c.h.b16 %v561
    %v1266 = vunpack.c.l.b16 %v562
    %v1267 = vunpack.c.h.b16 %v562
    %v1268 = vunpack.c.l.b16 %v563
    %v1269 = vunpack.c.h.b16 %v563
    %v1270 = vunpack.c.l.b16 %v564
    %v1271 = vunpack.c.h.b16 %v564
    %v1272 = vunpack.c.l.b16 %v565
    %v1273 = vunpack.c.h.b16 %v565
    %v1274 = vunpack.c.l.b16 %v566
    %v1275 = vunpack.c.h.b16 %v566
    %v1276 = vunpack.c.l.b16 %v567
    %v1277 = vunpack.c.h.b16 %v567
    %v1278 = vunpack.c.l.b16 %v568
    %v1279 = vunpack.c.h.b16 %v568
    %v1280 = vunpack.c.l.b16 %v569
    %v1281 = vunpack.c.h.b16 %v569
    %v1282 = vunpack.c.l.b16 %v570
    %v1283 = vunpack.c.h.b16 %v570
    %v1284 = vunpack.c.l.b16 %v571
    %v1285 = vunpack.c.h.b16 %v571
    %v1286 = vunpack.c.l.b16 %v572
    %v1287 = vunpack.c.h.b16 %v572
    %v1288 = vunpack.c.l.b16 %v573
    %v1289 = vunpack.c.h.b16 %v573
    %v1290 = vunpack.c.l.b16 %v574
    %v1291 = vunpack.c.h.b16 %v574
    %v1292 = vunpack.c.l.b16 %v575
    %v1293 = vunpack.c.h.b16 %v575
    %v1294 = vunpack.c.l.b16 %v576
    %v1295 = vunpack.c.h.b16 %v576
    %v1296 = vunpack.c.l.b16 %v577
    %v1297 = vunpack.c.h.b16 %v577
    %v1298 = vunpack.c.l.b16 %v578
    %v1299 = vunpack.c.h.b16 %v578
    %v1300 = vunpack.c.l.b16 %v579
    %v1301 = vunpack.c.h.b16 %v579
    %v1302 = vunpack.c.l.b16 %v580
    %v1303 = vunpack.c.h.b16 %v580
    %v1304 = vunpack.c.l.b16 %v581
    %v1305 = vunpack.c.h.b16 %v581
    %v1306 = vunpack.c.l.b16 %v582
    %v1307 = vunpack.c.h.b16 %v582
    %v1308 = vunpack.c.l.b16 %v583
    %v1309 = vunpack.c.h.b16 %v583
    %v1310 = vunpack.c.l.b16 %v584
    %v1311 = vunpack.c.h.b16 %v584
    %v1312 = vunpack.c.l.b16 %v585
    %v1313 = vunpack.c.h.b16 %v585
    %v1314 = vunpack.c.l.b16 %v586
    %v1315 = vunpack.c.h.b16 %v586
    %v1316 = vunpack.c.l.b16 %v587
    %v1317 = vunpack.c.h.b16 %v587
    %v1318 = vunpack.c.l.b16 %v588
    %v1319 = vunpack.c.h.b16 %v588
    %v1320 = vunpack.c.l.b16 %v589
    %v1321 = vunpack.c.h.b16 %v589
    %v1322 = vunpack.c.l.b16 %v590
    %v1323 = vunpack.c.h.b16 %v590
    %v1324 = vunpack.c.l.b16 %v591
    %v1325 = vunpack.c.h.b16 %v591
    %v1326 = vunpack.c.l.b16 %v592
    %v1327 = vunpack.c.h.b16 %v592
    %v1328 = vunpack.c.l.b16 %v593
    %v1329 = vunpack.c.h.b16 %v593
    %v1330 = vunpack.c.l.b16 %v594
    %v1331 = vunpack.c.h.b16 %v594
    %v1332 = vunpack.c.l.b16 %v595
    %v1333 = vunpack.c.h.b16 %v595
    %v1334 = vunpack.c.l.b16 %v596
    %v1335 = vunpack.c.h.b16 %v596
    %v1336 = vunpack.c.l.b16 %v597
    %v1337 = vunpack.c.h.b16 %v597
    %v1338 = vunpack.c.l.b16 %v598
    %v1339 = vunpack.c.h.b16 %v598
    %v1340 = vunpack.c.l.b16 %v599
    %v1341 = vunpack.c.h.b16 %v599
    %v1342 = vunpack.c.l.b16 %v600
    %v1343 = vunpack.c.h.b16 %v600
    %v1344 = vunpack.c.l.b16 %v601
    %v1345 = vunpack.c.h.b16 %v601
    %v1346 = vunpack.c.l.b16 %v602
    %v1347 = vunpack.c.h.b16 %v602
    %v1348 = vunpack.c.l.b16 %v603
    %v1349 = vunpack.c.h.b16 %v603
    %v1350 = vunpack.c.l.b16 %v604
    %v1351 = vunpack.c.h.b16 %v604
    %v1352 = vunpack.c.l.b16 %v605
    %v1353 = vunpack.c.h.b16 %v605
    %v1354 = vunpack.c.l.b16 %v606
    %v1355 = vunpack.c.h.b16 %v606
    %v1356 = vunpack.c.l.b16 %v607
    %v1357 = vunpack.c.h.b16 %v607
    %v1358 = vunpack.c.l.b16 %v608
    %v1359 = vunpack.c.h.b16 %v608
    %v1360 = vunpack.c.l.b16 %v609
    %v1361 = vunpack.c.h.b16 %v609
    %v1362 = vunpack.c.l.b16 %v610
    %v1363 = vunpack.c.h.b16 %v610
    %v1364 = vunpack.c.l.b16 %v611
    %v1365 = vunpack.c.h.b16 %v611
    %v1366 = vunpack.c.l.b16 %v612
    %v1367 = vunpack.c.h.b16 %v612
    %v1368 = vunpack.c.l.b16 %v613
    %v1369 = vunpack.c.h.b16 %v613
    %v1370 = vunpack.c.l.b16 %v614
    %v1371 = vunpack.c.h.b16 %v614
    %v1372 = vunpack.c.l.b16 %v615
    %v1373 = vunpack.c.h.b16 %v615
    %v1374 = vunpack.c.l.b16 %v616
    %v1375 = vunpack.c.h.b16 %v616
    %v1376 = vunpack.c.l.b16 %v617
    %v1377 = vunpack.c.h.b16 %v617
    %v1378 = vunpack.c.l.b16 %v618
    %v1379 = vunpack.c.h.b16 %v618
    %v1380 = vunpack.c.l.b16 %v619
    %v1381 = vunpack.c.h.b16 %v619
    %v1382 = vunpack.c.l.b16 %v620
    %v1383 = vunpack.c.h.b16 %v620
    %v1384 = vunpack.c.l.b16 %v621
    %v1385 = vunpack.c.h.b16 %v621
    %v1386 = vunpack.c.l.b16 %v622
    %v1387 = vunpack.c.h.b16 %v622
    %v1388 = vunpack.c.l.b16 %v623
    %v1389 = vunpack.c.h.b16 %v623
    %v1390 = vunpack.c.l.b16 %v624
    %v1391 = vunpack.c.h.b16 %v624
    %v1392 = vunpack.c.l.b16 %v625
    %v1393 = vunpack.c.h.b16 %v625
    %v1394 = vunpack.c.l.b16 %v626
    %v1395 = vunpack.c.h.b16 %v626
    %v1396 = vunpack.c.l.b16 %v627
    %v1397 = vunpack.c.h.b16 %v627
    %v1398 = vunpack.c.l.b16 %v628
    %v1399 = vunpack.c.h.b16 %v628
    %v1400 = vunpack.c.l.b16 %v629
    %v1401 = vunpack.c.h.b16 %v629
    %v1402 = vunpack.c.l.b16 %v630
    %v1403 = vunpack.c.h.b16 %v630
    %v1404 = vunpack.c.l.b16 %v631
    %v1405 = vunpack.c.h.b16 %v631
    %v1406 = vunpack.c.l.b16 %v632
    %v1407 = vunpack.c.h.b16 %v632
    %v1408 = vunpack.c.l.b16 %v633
    %v1409 = vunpack.c.h.b16 %v633
    %v1410 = vunpack.c.l.b16 %v634
    %v1411 = vunpack.c.h.b16 %v634
    %v1412 = vunpack.c.l.b16 %v635
    %v1413 = vunpack.c.h.b16 %v635
    %v1414 = vunpack.c.l.b16 %v636
    %v1415 = vunpack.c.h.b16 %v636
    %v1416 = vunpack.c.l.b16 %v637
    %v1417 = vunpack.c.h.b16 %v637
    %v1418 = vunpack.c.l.b16 %v638
    %v1419 = vunpack.c.h.b16 %v638
    %v1420 = vunpack.c.l.b16 %v639
    %v1421 = vunpack.c.h.b16 %v639
    %v1422 = vunpack.c.l.b16 %v640
    %v1423 = vunpack.c.h.b16 %v640
    %v1424 = vunpack.c.l.b16 %v641
    %v1425 = vunpack.c.h.b16 %v641
    %v1426 = vunpack.c.l.b16 %v642
    %v1427 = vunpack.c.h.b16 %v642
    %v1428 = vunpack.c.l.b16 %v643
    %v1429 = vunpack.c.h.b16 %v643
    %v1430 = vunpack.c.l.b16 %v644
    %v1431 = vunpack.c.h.b16 %v644
    %v1432 = vunpack.c.l.b16 %v645
    %v1433 = vunpack.c.h.b16 %v645
    %v1434 = vunpack.c.l.b16 %v646
    %v1435 = vunpack.c.h.b16 %v646
    %v1436 = vunpack.c.l.b16 %v647
    %v1437 = vunpack.c.h.b16 %v647
    %v1438 = vpack.c.b16 %v930, %v926
    %v1439 = vpack.c.b16 %v931, %v927
    %v1440 = vpack.c.b16 %v932, %v928
    %v1441 = vpack.c.b16 %v933, %v929
    %v1442 = vpack.c.b16 %v938, %v934
    %v1443 = vpack.c.b16 %v939, %v935
    %v1444 = vpack.c.b16 %v940, %v936
    %v1445 = vpack.c.b16 %v941, %v937
    %v1446 = vpack.c.b16 %v946, %v942
    %v1447 = vpack.c.b16 %v947, %v943
    %v1448 = vpack.c.b16 %v948, %v944
    %v1449 = vpack.c.b16 %v949, %v945
    %v1450 = vpack.c.b16 %v954, %v950
    %v1451 = vpack.c.b16 %v955, %v951
    %v1452 = vpack.c.b16 %v956, %v952
    %v1453 = vpack.c.b16 %v957, %v953
    %v1454 = vpack.c.b16 %v962, %v958
    %v1455 = vpack.c.b16 %v963, %v959
    %v1456 = vpack.c.b16 %v964, %v960
    %v1457 = vpack.c.b16 %v965, %v961
    %v1458 = vpack.c.b16 %v970, %v966
    %v1459 = vpack.c.b16 %v971, %v967
    %v1460 = vpack.c.b16 %v972, %v968
    %v1461 = vpack.c.b16 %v973, %v969
    %v1462 = vpack.c.b16 %v978, %v974
    %v1463 = vpack.c.b16 %v979, %v975
    %v1464 = vpack.c.b16 %v980, %v976
    %v1465 = vpack.c.b16 %v981, %v977
    %v1466 = vpack.c.b16 %v986, %v982
    %v1467 = vpack.c.b16 %v987, %v983
    %v1468 = vpack.c.b16 %v988, %v984
    %v1469 = vpack.c.b16 %v989, %v985
    %v1470 = vpack.c.b16 %v994, %v990
    %v1471 = vpack.c.b16 %v995, %v991
    %v1472 = vpack.c.b16 %v996, %v992
    %v1473 = vpack.c.b16 %v997, %v993
    %v1474 = vpack.c.b16 %v1002, %v998
    %v1475 = vpack.c.b16 %v1003, %v999
    %v1476 = vpack.c.b16 %v1004, %v1000
    %v1477 = vpack.c.b16 %v1005, %v1001
    %v1478 = vpack.c.b16 %v1010, %v1006
    %v1479 = vpack.c.b16 %v1011, %v1007
    %v1480 = vpack.c.b16 %v1012, %v1008
    %v1481 = vpack.c.b16 %v1013, %v1009
    %v1482 = vpack.c.b16 %v1018, %v1014
    %v1483 = vpack.c.b16 %v1019, %v1015
    %v1484 = vpack.c.b16 %v1020, %v1016
    %v1485 = vpack.c.b16 %v1021, %v1017
    %v1486 = vpack.c.b16 %v1026, %v1022
    %v1487 = vpack.c.b16 %v1027, %v1023
    %v1488 = vpack.c.b16 %v1028, %v1024
    %v1489 = vpack.c.b16 %v1029, %v1025
    %v1490 = vpack.c.b16 %v1034, %v1030
    %v1491 = vpack.c.b16 %v1035, %v1031
    %v1492 = vpack.c.b16 %v1036, %v1032
    %v1493 = vpack.c.b16 %v1037, %v1033
    %v1494 = vpack.c.b16 %v1042, %v1038
    %v1495 = vpack.c.b16 %v1043, %v1039
    %v1496 = vpack.c.b16 %v1044, %v1040
    %v1497 = vpack.c.b16 %v1045, %v1041
    %v1498 = vpack.c.b16 %v1050, %v1046
    %v1499 = vpack.c.b16 %v1051, %v1047
    %v1500 = vpack.c.b16 %v1052, %v1048
    %v1501 = vpack.c.b16 %v1053, %v1049
    %v1502 = vpack.c.b16 %v1058, %v1054
    %v1503 = vpack.c.b16 %v1059, %v1055
    %v1504 = vpack.c.b16 %v1060, %v1056
    %v1505 = vpack.c.b16 %v1061, %v1057
    %v1506 = vpack.c.b16 %v1066, %v1062
    %v1507 = vpack.c.b16 %v1067, %v1063
    %v1508 = vpack.c.b16 %v1068, %v1064
    %v1509 = vpack.c.b16 %v1069, %v1065
    %v1510 = vpack.c.b16 %v1074, %v1070
    %v1511 = vpack.c.b16 %v1075, %v1071
    %v1512 = vpack.c.b16 %v1076, %v1072
    %v1513 = vpack.c.b16 %v1077, %v1073
    %v1514 = vpack.c.b16 %v1082, %v1078
    %v1515 = vpack.c.b16 %v1083, %v1079
    %v1516 = vpack.c.b16 %v1084, %v1080
    %v1517 = vpack.c.b16 %v1085, %v1081
    %v1518 = vpack.c.b16 %v1090, %v1086
    %v1519 = vpack.c.b16 %v1091, %v1087
    %v1520 = vpack.c.b16 %v1092, %v1088
    %v1521 = vpack.c.b16 %v1093, %v1089
    %v1522 = vpack.c.b16 %v1098, %v1094
    %v1523 = vpack.c.b16 %v1099, %v1095
    %v1524 = vpack.c.b16 %v1100, %v1096
    %v1525 = vpack.c.b16 %v1101, %v1097
    %v1526 = vpack.c.b16 %v1106, %v1102
    %v1527 = vpack.c.b16 %v1107, %v1103
    %v1528 = vpack.c.b16 %v1108, %v1104
    %v1529 = vpack.c.b16 %v1109, %v1105
    %v1530 = vpack.c.b16 %v1114, %v1110
    %v1531 = vpack.c.b16 %v1115, %v1111
    %v1532 = vpack.c.b16 %v1116, %v1112
    %v1533 = vpack.c.b16 %v1117, %v1113
    %v1534 = vpack.c.b16 %v1122, %v1118
    %v1535 = vpack.c.b16 %v1123, %v1119
    %v1536 = vpack.c.b16 %v1124, %v1120
    %v1537 = vpack.c.b16 %v1125, %v1121
    %v1538 = vpack.c.b16 %v1130, %v1126
    %v1539 = vpack.c.b16 %v1131, %v1127
    %v1540 = vpack.c.b16 %v1132, %v1128
    %v1541 = vpack.c.b16 %v1133, %v1129
    %v1542 = vpack.c.b16 %v1138, %v1134
    %v1543 = vpack.c.b16 %v1139, %v1135
    %v1544 = vpack.c.b16 %v1140, %v1136
    %v1545 = vpack.c.b16 %v1141, %v1137
    %v1546 = vpack.c.b16 %v1146, %v1142
    %v1547 = vpack.c.b16 %v1147, %v1143
    %v1548 = vpack.c.b16 %v1148, %v1144
    %v1549 = vpack.c.b16 %v1149, %v1145
    %v1550 = vpack.c.b16 %v1154, %v1150
    %v1551 = vpack.c.b16 %v1155, %v1151
    %v1552 = vpack.c.b16 %v1156, %v1152
    %v1553 = vpack.c.b16 %v1157, %v1153
    %v1554 = vpack.c.b16 %v1162, %v1158
    %v1555 = vpack.c.b16 %v1163, %v1159
    %v1556 = vpack.c.b16 %v1164, %v1160
    %v1557 = vpack.c.b16 %v1165, %v1161
    %v1558 = vpack.c.b16 %v1170, %v1166
    %v1559 = vpack.c.b16 %v1171, %v1167
    %v1560 = vpack.c.b16 %v1172, %v1168
    %v1561 = vpack.c.b16 %v1173, %v1169
    %v1562 = vpack.c.b16 %v1178, %v1174
    %v1563 = vpack.c.b16 %v1179, %v1175
    %v1564 = vpack.c.b16 %v1180, %v1176
    %v1565 = vpack.c.b16 %v1181, %v1177
    %v1566 = vpack.c.b16 %v1186, %v1182
    %v1567 = vpack.c.b16 %v1187, %v1183
    %v1568 = vpack.c.b16 %v1188, %v1184
    %v1569 = vpack.c.b16 %v1189, %v1185
    %v1570 = vpack.c.b16 %v1194, %v1190
    %v1571 = vpack.c.b16 %v1195, %v1191
    %v1572 = vpack.c.b16 %v1196, %v1192
    %v1573 = vpack.c.b16 %v1197, %v1193
    %v1574 = vpack.c.b16 %v1202, %v1198
    %v1575 = vpack.c.b16 %v1203, %v1199
    %v1576 = vpack.c.b16 %v1204, %v1200
    %v1577 = vpack.c.b16 %v1205, %v1201
    %v1578 = vpack.c.b16 %v1210, %v1206
    %v1579 = vpack.c.b16 %v1211, %v1207
    %v1580 = vpack.c.b16 %v1212, %v1208
    %v1581 = vpack.c.b16 %v1213, %v1209
    %v1582 = vpack.c.b16 %v1218, %v1214
    %v1583 = vpack.c.b16 %v1219, %v1215
    %v1584 = vpack.c.b16 %v1220, %v1216
    %v1585 = vpack.c.b16 %v1221, %v1217
    %v1586 = vpack.c.b16 %v1226, %v1222
    %v1587 = vpack.c.b16 %v1227, %v1223
    %v1588 = vpack.c.b16 %v1228, %v1224
    %v1589 = vpack.c.b16 %v1229, %v1225
    %v1590 = vpack.c.b16 %v1234, %v1230
    %v1591 = vpack.c.b16 %v1235, %v1231
    %v1592 = vpack.c.b16 %v1236, %v1232
    %v1593 = vpack.c.b16 %v1237, %v1233
    %v1594 = vpack.c.b16 %v1242, %v1238
    %v1595 = vpack.c.b16 %v1243, %v1239
    %v1596 = vpack.c.b16 %v1244, %v1240
    %v1597 = vpack.c.b16 %v1245, %v1241
    %v1598 = vpack.c.b16 %v1250, %v1246
    %v1599 = vpack.c.b16 %v1251, %v1247
    %v1600 = vpack.c.b16 %v1252, %v1248
    %v1601 = vpack.c.b16 %v1253, %v1249
    %v1602 = vpack.c.b16 %v1258, %v1254
    %v1603 = vpack.c.b16 %v1259, %v1255
    %v1604 = vpack.c.b16 %v1260, %v1256
    %v1605 = vpack.c.b16 %v1261, %v1257
    %v1606 = vpack.c.b16 %v1266, %v1262
    %v1607 = vpack.c.b16 %v1267, %v1263
    %v1608 = vpack.c.b16 %v1268, %v1264
    %v1609 = vpack.c.b16 %v1269, %v1265
    %v1610 = vpack.c.b16 %v1274, %v1270
    %v1611 = vpack.c.b16 %v1275, %v1271
    %v1612 = vpack.c.b16 %v1276, %v1272
    %v1613 = vpack.c.b16 %v1277, %v1273
    %v1614 = vpack.c.b16 %v1282, %v1278
    %v1615 = vpack.c.b16 %v1283, %v1279
    %v1616 = vpack.c.b16 %v1284, %v1280
    %v1617 = vpack.c.b16 %v1285, %v1281
    %v1618 = vpack.c.b16 %v1290, %v1286
    %v1619 = vpack.c.b16 %v1291, %v1287
    %v1620 = vpack.c.b16 %v1292, %v1288
    %v1621 = vpack.c.b16 %v1293, %v1289
    %v1622 = vpack.c.b16 %v1298, %v1294
    %v1623 = vpack.c.b16 %v1299, %v1295
    %v1624 = vpack.c.b16 %v1300, %v1296
    %v1625 = vpack.c.b16 %v1301, %v1297
    %v1626 = vpack.c.b16 %v1306, %v1302
    %v1627 = vpack.c.b16 %v1307, %v1303
    %v1628 = vpack.c.b16 %v1308, %v1304
    %v1629 = vpack.c.b16 %v1309, %v1305
    %v1630 = vpack.c.b16 %v1314, %v1310
    %v1631 = vpack.c.b16 %v1315, %v1311
    %v1632 = vpack.c.b16 %v1316, %v1312
    %v1633 = vpack.c.b16 %v1317, %v1313
    %v1634 = vpack.c.b16 %v1322, %v1318
    %v1635 = vpack.c.b16 %v1323, %v1319
    %v1636 = vpack.c.b16 %v1324, %v1320
    %v1637 = vpack.c.b16 %v1325, %v1321
    %v1638 = vpack.c.b16 %v1330, %v1326
    %v1639 = vpack.c.b16 %v1331, %v1327
    %v1640 = vpack.c.b16 %v1332, %v1328
    %v1641 = vpack.c.b16 %v1333, %v1329
    %v1642 = vpack.c.b16 %v1338, %v1334
    %v1643 = vpack.c.b16 %v1339, %v1335
    %v1644 = vpack.c.b16 %v1340, %v1336
    %v1645 = vpack.c.b16 %v1341, %v1337
    %v1646 = vpack.c.b16 %v1346, %v1342
    %v1647 = vpack.c.b16 %v1347, %v1343
    %v1648 = vpack.c.b16 %v1348, %v1344
    %v1649 = vpack.c.b16 %v1349, %v1345
    %v1650 = vpack.c.b16 %v1354, %v1350
    %v1651 = vpack.c.b16 %v1355, %v1351
    %v1652 = vpack.c.b16 %v1356, %v1352
    %v1653 = vpack.c.b16 %v1357, %v1353
    %v1654 = vpack.c.b16 %v1362, %v1358
    %v1655 = vpack.c.b16 %v1363, %v1359
    %v1656 = vpack.c.b16 %v1364, %v1360
    %v1657 = vpack.c.b16 %v1365, %v1361
    %v1658 = vpack.c.b16 %v1370, %v1366
    %v1659 = vpack.c.b16 %v1371, %v1367
    %v1660 = vpack.c.b16 %v1372, %v1368
    %v1661 = vpack.c.b16 %v1373, %v1369
    %v1662 = vpack.c.b16 %v1378, %v1374
    %v1663 = vpack.c.b16 %v1379, %v1375
    %v1664 = vpack.c.b16 %v1380, %v1376
    %v1665 = vpack.c.b16 %v1381, %v1377
    %v1666 = vpack.c.b16 %v1386, %v1382
    %v1667 = vpack.c.b16 %v1387, %v1383
    %v1668 = vpack.c.b16 %v1388, %v1384
    %v1669 = vpack.c.b16 %v1389, %v1385
    %v1670 = vpack.c.b16 %v1394, %v1390
    %v1671 = vpack.c.b16 %v1395, %v1391
    %v1672 = vpack.c.b16 %v1396, %v1392
    %v1673 = vpack.c.b16 %v1397, %v1393
    %v1674 = vpack.c.b16 %v1402, %v1398
    %v1675 = vpack.c.b16 %v1403, %v1399
    %v1676 = vpack.c.b16 %v1404, %v1400
    %v1677 = vpack.c.b16 %v1405, %v1401
    %v1678 = vpack.c.b16 %v1410, %v1406
    %v1679 = vpack.c.b16 %v1411, %v1407
    %v1680 = vpack.c.b16 %v1412, %v1408
    %v1681 = vpack.c.b16 %v1413, %v1409
    %v1682 = vpack.c.b16 %v1418, %v1414
    %v1683 = vpack.c.b16 %v1419, %v1415
    %v1684 = vpack.c.b16 %v1420, %v1416
    %v1685 = vpack.c.b16 %v1421, %v1417
    %v1686 = vpack.c.b16 %v1426, %v1422
    %v1687 = vpack.c.b16 %v1427, %v1423
    %v1688 = vpack.c.b16 %v1428, %v1424
    %v1689 = vpack.c.b16 %v1429, %v1425
    %v1690 = vpack.c.b16 %v1434, %v1430
    %v1691 = vpack.c.b16 %v1435, %v1431
    %v1692 = vpack.c.b16 %v1436, %v1432
    %v1693 = vpack.c.b16 %v1437, %v1433
    %1950 = vmatprep.subr.bf16.mxu0 %v1439
    %1951 = vmatpush1.bf16.msra.mxu0 %v1438
    %1952 = vmatprep.subr.bf16.mxu0 %v1443
    %1953 = vmatpush1.bf16.msra.mxu0 %v1442
    %1954 = vmatprep.subr.bf16.mxu0 %v1447
    %1955 = vmatpush1.bf16.msra.mxu0 %v1446
    %1956 = vmatprep.subr.bf16.mxu0 %v1451
    %1957 = vmatpush1.bf16.msra.mxu0 %v1450
    %1958 = vmatprep.subr.bf16.mxu0 %v1455
    %1959 = vmatpush1.bf16.msra.mxu0 %v1454
    %1960 = vmatprep.subr.bf16.mxu0 %v1459
    %1961 = vmatpush1.bf16.msra.mxu0 %v1458
    %1962 = vmatprep.subr.bf16.mxu0 %v1463
    %1963 = vmatpush1.bf16.msra.mxu0 %v1462
    %1964 = vmatprep.subr.bf16.mxu0 %v1467
    %1965 = vmatpush1.bf16.msra.mxu0 %v1466
    %1966 = vmatprep.subr.bf16.mxu0 %v1471
    %1967 = vmatpush1.bf16.msra.mxu0 %v1470
    %1968 = vmatprep.subr.bf16.mxu0 %v1475
    %1969 = vmatpush1.bf16.msra.mxu0 %v1474
    %1970 = vmatprep.subr.bf16.mxu0 %v1479
    %1971 = vmatpush1.bf16.msra.mxu0 %v1478
    %1972 = vmatprep.subr.bf16.mxu0 %v1483
    %1973 = vmatpush1.bf16.msra.mxu0 %v1482
    %1974 = vmatprep.subr.bf16.mxu0 %v1487
    %1975 = vmatpush1.bf16.msra.mxu0 %v1486
    %1976 = vmatprep.subr.bf16.mxu0 %v1491
    %1977 = vmatpush1.bf16.msra.mxu0 %v1490
    %1978 = vmatprep.subr.bf16.mxu0 %v1495
    %1979 = vmatpush1.bf16.msra.mxu0 %v1494
    %1980 = vmatprep.subr.bf16.mxu0 %v1499
    %1981 = vmatpush1.bf16.msra.mxu0 %v1498
    %1982 = vmatprep.mubr.bf16.mxu0 %v385
    %1983 = vmatmul.mubr.bf16.gmra.mrb[0].mxu0 %v384
    %v1984 = vpop.f32.mrb[0].mxu0
    %v1985 = vadd.f32 %v653, %v1984
    %v1986 = vpop.f32.mrb[0].mxu0
    %v1987 = vadd.f32 %v657, %v1986
    %v1988 = vpop.f32.mrb[0].mxu0
    %v1989 = vpop.f32.mrb[0].mxu0
    %1990 = vdwg.mxu0
    %1991 = vmatprep.subr.bf16.mxu0 %v1503
    %1992 = vmatpush1.bf16.msra.mxu0 %v1502
    %1993 = vmatprep.subr.bf16.mxu0 %v1507
    %1994 = vmatpush1.bf16.msra.mxu0 %v1506
    %1995 = vmatprep.subr.bf16.mxu0 %v1511
    %1996 = vmatpush1.bf16.msra.mxu0 %v1510
    %1997 = vmatprep.subr.bf16.mxu0 %v1515
    %1998 = vmatpush1.bf16.msra.mxu0 %v1514
    %1999 = vmatprep.subr.bf16.mxu0 %v1519
    %2000 = vmatpush1.bf16.msra.mxu0 %v1518
    %2001 = vmatprep.subr.bf16.mxu0 %v1523
    %2002 = vmatpush1.bf16.msra.mxu0 %v1522
    %2003 = vmatprep.subr.bf16.mxu0 %v1527
    %2004 = vmatpush1.bf16.msra.mxu0 %v1526
    %2005 = vmatprep.subr.bf16.mxu0 %v1531
    %2006 = vmatpush1.bf16.msra.mxu0 %v1530
    %2007 = vmatprep.subr.bf16.mxu0 %v1535
    %2008 = vmatpush1.bf16.msra.mxu0 %v1534
    %2009 = vmatprep.subr.bf16.mxu0 %v1539
    %2010 = vmatpush1.bf16.msra.mxu0 %v1538
    %2011 = vmatprep.subr.bf16.mxu0 %v1543
    %2012 = vmatpush1.bf16.msra.mxu0 %v1542
    %2013 = vmatprep.subr.bf16.mxu0 %v1547
    %2014 = vmatpush1.bf16.msra.mxu0 %v1546
    %2015 = vmatprep.subr.bf16.mxu0 %v1551
    %2016 = vmatpush1.bf16.msra.mxu0 %v1550
    %2017 = vmatprep.subr.bf16.mxu0 %v1555
    %2018 = vmatpush1.bf16.msra.mxu0 %v1554
    %2019 = vmatprep.subr.bf16.mxu0 %v1559
    %2020 = vmatpush1.bf16.msra.mxu0 %v1558
    %2021 = vmatprep.subr.bf16.mxu0 %v1563
    %2022 = vmatpush1.bf16.msra.mxu0 %v1562
    %2023 = vmatprep.mubr.bf16.mxu0 %v387
    %2024 = vmatmul.mubr.bf16.gmra.mrb[0].mxu0 %v386
    %v2025 = vpop.f32.mrb[0].mxu0
    %v2026 = vadd.f32 %v1985, %v2025
    %v2027 = vpop.f32.mrb[0].mxu0
    %v2028 = vadd.f32 %v1987, %v2027
    %v2029 = vpop.f32.mrb[0].mxu0
    %v2030 = vpop.f32.mrb[0].mxu0
    %2031 = vdwg.mxu0
    %2032 = vmatprep.subr.bf16.mxu0 %v1567
    %2033 = vmatpush1.bf16.msra.mxu0 %v1566
    %2034 = vmatprep.subr.bf16.mxu0 %v1571
    %2035 = vmatpush1.bf16.msra.mxu0 %v1570
    %2036 = vmatprep.subr.bf16.mxu0 %v1575
    %2037 = vmatpush1.bf16.msra.mxu0 %v1574
    %2038 = vmatprep.subr.bf16.mxu0 %v1579
    %2039 = vmatpush1.bf16.msra.mxu0 %v1578
    %2040 = vmatprep.subr.bf16.mxu0 %v1583
    %2041 = vmatpush1.bf16.msra.mxu0 %v1582
    %2042 = vmatprep.subr.bf16.mxu0 %v1587
    %2043 = vmatpush1.bf16.msra.mxu0 %v1586
    %2044 = vmatprep.subr.bf16.mxu0 %v1591
    %2045 = vmatpush1.bf16.msra.mxu0 %v1590
    %2046 = vmatprep.subr.bf16.mxu0 %v1595
    %2047 = vmatpush1.bf16.msra.mxu0 %v1594
    %2048 = vmatprep.subr.bf16.mxu0 %v1599
    %2049 = vmatpush1.bf16.msra.mxu0 %v1598
    %2050 = vmatprep.subr.bf16.mxu0 %v1603
    %2051 = vmatpush1.bf16.msra.mxu0 %v1602
    %2052 = vmatprep.subr.bf16.mxu0 %v1607
    %2053 = vmatpush1.bf16.msra.mxu0 %v1606
    %2054 = vmatprep.subr.bf16.mxu0 %v1611
    %2055 = vmatpush1.bf16.msra.mxu0 %v1610
    %2056 = vmatprep.subr.bf16.mxu0 %v1615
    %2057 = vmatpush1.bf16.msra.mxu0 %v1614
    %2058 = vmatprep.subr.bf16.mxu0 %v1619
    %2059 = vmatpush1.bf16.msra.mxu0 %v1618
    %2060 = vmatprep.subr.bf16.mxu0 %v1623
    %2061 = vmatpush1.bf16.msra.mxu0 %v1622
    %2062 = vmatprep.subr.bf16.mxu0 %v1627
    %2063 = vmatpush1.bf16.msra.mxu0 %v1626
    %2064 = vmatprep.mubr.bf16.mxu0 %v389
    %2065 = vmatmul.mubr.bf16.gmra.mrb[0].mxu0 %v388
    %v2066 = vpop.f32.mrb[0].mxu0
    %v2067 = vadd.f32 %v2026, %v2066
    %v2068 = vpop.f32.mrb[0].mxu0
    %v2069 = vadd.f32 %v2028, %v2068
    %v2070 = vpop.f32.mrb[0].mxu0
    %v2071 = vpop.f32.mrb[0].mxu0
    %2072 = vdwg.mxu0
    %2073 = vmatprep.subr.bf16.mxu0 %v1631
    %2074 = vmatpush1.bf16.msra.mxu0 %v1630
    %2075 = vmatprep.subr.bf16.mxu0 %v1635
    %2076 = vmatpush1.bf16.msra.mxu0 %v1634
    %2077 = vmatprep.subr.bf16.mxu0 %v1639
    %2078 = vmatpush1.bf16.msra.mxu0 %v1638
    %2079 = vmatprep.subr.bf16.mxu0 %v1643
    %2080 = vmatpush1.bf16.msra.mxu0 %v1642
    %2081 = vmatprep.subr.bf16.mxu0 %v1647
    %2082 = vmatpush1.bf16.msra.mxu0 %v1646
    %2083 = vmatprep.subr.bf16.mxu0 %v1651
    %2084 = vmatpush1.bf16.msra.mxu0 %v1650
    %2085 = vmatprep.subr.bf16.mxu0 %v1655
    %2086 = vmatpush1.bf16.msra.mxu0 %v1654
    %2087 = vmatprep.subr.bf16.mxu0 %v1659
    %2088 = vmatpush1.bf16.msra.mxu0 %v1658
    %2089 = vmatprep.subr.bf16.mxu0 %v1663
    %2090 = vmatpush1.bf16.msra.mxu0 %v1662
    %2091 = vmatprep.subr.bf16.mxu0 %v1667
    %2092 = vmatpush1.bf16.msra.mxu0 %v1666
    %2093 = vmatprep.subr.bf16.mxu0 %v1671
    %2094 = vmatpush1.bf16.msra.mxu0 %v1670
    %2095 = vmatprep.subr.bf16.mxu0 %v1675
    %2096 = vmatpush1.bf16.msra.mxu0 %v1674
    %2097 = vmatprep.subr.bf16.mxu0 %v1679
    %2098 = vmatpush1.bf16.msra.mxu0 %v1678
    %2099 = vmatprep.subr.bf16.mxu0 %v1683
    %2100 = vmatpush1.bf16.msra.mxu0 %v1682
    %2101 = vmatprep.subr.bf16.mxu0 %v1687
    %2102 = vmatpush1.bf16.msra.mxu0 %v1686
    %2103 = vmatprep.subr.bf16.mxu0 %v1691
    %2104 = vmatpush1.bf16.msra.mxu0 %v1690
    %2105 = vmatprep.mubr.bf16.mxu0 %v391
    %2106 = vmatmul.mubr.bf16.gmra.mrb[0].mxu0 %v390
    %v2107 = vpop.f32.mrb[0].mxu0
    %v2108 = vadd.f32 %v2067, %v2107
    %v2109 = vpop.f32.mrb[0].mxu0
    %v2110 = vadd.f32 %v2069, %v2109
    %v2111 = vpop.f32.mrb[0].mxu0
    %v2112 = vpop.f32.mrb[0].mxu0
    %2113 = vdwg.mxu0
    %2114 = vmatprep.subr.bf16.mxu0 %v1441
    %2115 = vmatpush1.bf16.msra.mxu0 %v1440
    %2116 = vmatprep.subr.bf16.mxu0 %v1445
    %2117 = vmatpush1.bf16.msra.mxu0 %v1444
    %2118 = vmatprep.subr.bf16.mxu0 %v1449
    %2119 = vmatpush1.bf16.msra.mxu0 %v1448
    %2120 = vmatprep.subr.bf16.mxu0 %v1453
    %2121 = vmatpush1.bf16.msra.mxu0 %v1452
    %2122 = vmatprep.subr.bf16.mxu0 %v1457
    %2123 = vmatpush1.bf16.msra.mxu0 %v1456
    %2124 = vmatprep.subr.bf16.mxu0 %v1461
    %2125 = vmatpush1.bf16.msra.mxu0 %v1460
    %2126 = vmatprep.subr.bf16.mxu0 %v1465
    %2127 = vmatpush1.bf16.msra.mxu0 %v1464
    %2128 = vmatprep.subr.bf16.mxu0 %v1469
    %2129 = vmatpush1.bf16.msra.mxu0 %v1468
    %2130 = vmatprep.subr.bf16.mxu0 %v1473
    %2131 = vmatpush1.bf16.msra.mxu0 %v1472
    %2132 = vmatprep.subr.bf16.mxu0 %v1477
    %2133 = vmatpush1.bf16.msra.mxu0 %v1476
    %2134 = vmatprep.subr.bf16.mxu0 %v1481
    %2135 = vmatpush1.bf16.msra.mxu0 %v1480
    %2136 = vmatprep.subr.bf16.mxu0 %v1485
    %2137 = vmatpush1.bf16.msra.mxu0 %v1484
    %2138 = vmatprep.subr.bf16.mxu0 %v1489
    %2139 = vmatpush1.bf16.msra.mxu0 %v1488
    %2140 = vmatprep.subr.bf16.mxu0 %v1493
    %2141 = vmatpush1.bf16.msra.mxu0 %v1492
    %2142 = vmatprep.subr.bf16.mxu0 %v1497
    %2143 = vmatpush1.bf16.msra.mxu0 %v1496
    %2144 = vmatprep.subr.bf16.mxu0 %v1501
    %2145 = vmatpush1.bf16.msra.mxu0 %v1500
    %2146 = vmatprep.mubr.bf16.mxu0 %v385
    %2147 = vmatmul.mubr.bf16.gmra.mrb[0].mxu0 %v384
    %v2148 = vpop.f32.mrb[0].mxu0
    %v2149 = vadd.f32 %v661, %v2148
    %v2150 = vpop.f32.mrb[0].mxu0
    %v2151 = vadd.f32 %v665, %v2150
    %v2152 = vpop.f32.mrb[0].mxu0
    %v2153 = vpop.f32.mrb[0].mxu0
    %2154 = vdwg.mxu0
    %2155 = vmatprep.subr.bf16.mxu0 %v1505
    %2156 = vmatpush1.bf16.msra.mxu0 %v1504
    %2157 = vmatprep.subr.bf16.mxu0 %v1509
    %2158 = vmatpush1.bf16.msra.mxu0 %v1508
    %2159 = vmatprep.subr.bf16.mxu0 %v1513
    %2160 = vmatpush1.bf16.msra.mxu0 %v1512
    %2161 = vmatprep.subr.bf16.mxu0 %v1517
    %2162 = vmatpush1.bf16.msra.mxu0 %v1516
    %2163 = vmatprep.subr.bf16.mxu0 %v1521
    %2164 = vmatpush1.bf16.msra.mxu0 %v1520
    %2165 = vmatprep.subr.bf16.mxu0 %v1525
    %2166 = vmatpush1.bf16.msra.mxu0 %v1524
    %2167 = vmatprep.subr.bf16.mxu0 %v1529
    %2168 = vmatpush1.bf16.msra.mxu0 %v1528
    %2169 = vmatprep.subr.bf16.mxu0 %v1533
    %2170 = vmatpush1.bf16.msra.mxu0 %v1532
    %2171 = vmatprep.subr.bf16.mxu0 %v1537
    %2172 = vmatpush1.bf16.msra.mxu0 %v1536
    %2173 = vmatprep.subr.bf16.mxu0 %v1541
    %2174 = vmatpush1.bf16.msra.mxu0 %v1540
    %2175 = vmatprep.subr.bf16.mxu0 %v1545
    %2176 = vmatpush1.bf16.msra.mxu0 %v1544
    %2177 = vmatprep.subr.bf16.mxu0 %v1549
    %2178 = vmatpush1.bf16.msra.mxu0 %v1548
    %2179 = vmatprep.subr.bf16.mxu0 %v1553
    %2180 = vmatpush1.bf16.msra.mxu0 %v1552
    %2181 = vmatprep.subr.bf16.mxu0 %v1557
    %2182 = vmatpush1.bf16.msra.mxu0 %v1556
    %2183 = vmatprep.subr.bf16.mxu0 %v1561
    %2184 = vmatpush1.bf16.msra.mxu0 %v1560
    %2185 = vmatprep.subr.bf16.mxu0 %v1565
    %2186 = vmatpush1.bf16.msra.mxu0 %v1564
    %2187 = vmatprep.mubr.bf16.mxu0 %v387
    %2188 = vmatmul.mubr.bf16.gmra.mrb[0].mxu0 %v386
    %v2189 = vpop.f32.mrb[0].mxu0
    %v2190 = vadd.f32 %v2149, %v2189
    %v2191 = vpop.f32.mrb[0].mxu0
    %v2192 = vadd.f32 %v2151, %v2191
    %v2193 = vpop.f32.mrb[0].mxu0
    %v2194 = vpop.f32.mrb[0].mxu0
    %2195 = vdwg.mxu0
    %2196 = vmatprep.subr.bf16.mxu0 %v1569
    %2197 = vmatpush1.bf16.msra.mxu0 %v1568
    %2198 = vmatprep.subr.bf16.mxu0 %v1573
    %2199 = vmatpush1.bf16.msra.mxu0 %v1572
    %2200 = vmatprep.subr.bf16.mxu0 %v1577
    %2201 = vmatpush1.bf16.msra.mxu0 %v1576
    %2202 = vmatprep.subr.bf16.mxu0 %v1581
    %2203 = vmatpush1.bf16.msra.mxu0 %v1580
    %2204 = vmatprep.subr.bf16.mxu0 %v1585
    %2205 = vmatpush1.bf16.msra.mxu0 %v1584
    %2206 = vmatprep.subr.bf16.mxu0 %v1589
    %2207 = vmatpush1.bf16.msra.mxu0 %v1588
    %2208 = vmatprep.subr.bf16.mxu0 %v1593
    %2209 = vmatpush1.bf16.msra.mxu0 %v1592
    %2210 = vmatprep.subr.bf16.mxu0 %v1597
    %2211 = vmatpush1.bf16.msra.mxu0 %v1596
    %2212 = vmatprep.subr.bf16.mxu0 %v1601
    %2213 = vmatpush1.bf16.msra.mxu0 %v1600
    %2214 = vmatprep.subr.bf16.mxu0 %v1605
    %2215 = vmatpush1.bf16.msra.mxu0 %v1604
    %2216 = vmatprep.subr.bf16.mxu0 %v1609
    %2217 = vmatpush1.bf16.msra.mxu0 %v1608
    %2218 = vmatprep.subr.bf16.mxu0 %v1613
    %2219 = vmatpush1.bf16.msra.mxu0 %v1612
    %2220 = vmatprep.subr.bf16.mxu0 %v1617
    %2221 = vmatpush1.bf16.msra.mxu0 %v1616
    %2222 = vmatprep.subr.bf16.mxu0 %v1621
    %2223 = vmatpush1.bf16.msra.mxu0 %v1620
    %2224 = vmatprep.subr.bf16.mxu0 %v1625
    %2225 = vmatpush1.bf16.msra.mxu0 %v1624
    %2226 = vmatprep.subr.bf16.mxu0 %v1629
    %2227 = vmatpush1.bf16.msra.mxu0 %v1628
    %2228 = vmatprep.mubr.bf16.mxu0 %v389
    %2229 = vmatmul.mubr.bf16.gmra.mrb[0].mxu0 %v388
    %v2230 = vpop.f32.mrb[0].mxu0
    %v2231 = vadd.f32 %v2190, %v2230
    %v2232 = vpop.f32.mrb[0].mxu0
    %v2233 = vadd.f32 %v2192, %v2232
    %v2234 = vpop.f32.mrb[0].mxu0
    %v2235 = vpop.f32.mrb[0].mxu0
    %2236 = vdwg.mxu0
    %2237 = vmatprep.subr.bf16.mxu0 %v1633
    %2238 = vmatpush1.bf16.msra.mxu0 %v1632
    %2239 = vmatprep.subr.bf16.mxu0 %v1637
    %2240 = vmatpush1.bf16.msra.mxu0 %v1636
    %2241 = vmatprep.subr.bf16.mxu0 %v1641
    %2242 = vmatpush1.bf16.msra.mxu0 %v1640
    %2243 = vmatprep.subr.bf16.mxu0 %v1645
    %2244 = vmatpush1.bf16.msra.mxu0 %v1644
    %2245 = vmatprep.subr.bf16.mxu0 %v1649
    %2246 = vmatpush1.bf16.msra.mxu0 %v1648
    %2247 = vmatprep.subr.bf16.mxu0 %v1653
    %2248 = vmatpush1.bf16.msra.mxu0 %v1652
    %2249 = vmatprep.subr.bf16.mxu0 %v1657
    %2250 = vmatpush1.bf16.msra.mxu0 %v1656
    %2251 = vmatprep.subr.bf16.mxu0 %v1661
    %2252 = vmatpush1.bf16.msra.mxu0 %v1660
    %2253 = vmatprep.subr.bf16.mxu0 %v1665
    %2254 = vmatpush1.bf16.msra.mxu0 %v1664
    %2255 = vmatprep.subr.bf16.mxu0 %v1669
    %2256 = vmatpush1.bf16.msra.mxu0 %v1668
    %2257 = vmatprep.subr.bf16.mxu0 %v1673
    %2258 = vmatpush1.bf16.msra.mxu0 %v1672
    %2259 = vmatprep.subr.bf16.mxu0 %v1677
    %2260 = vmatpush1.bf16.msra.mxu0 %v1676
    %2261 = vmatprep.subr.bf16.mxu0 %v1681
    %2262 = vmatpush1.bf16.msra.mxu0 %v1680
    %2263 = vmatprep.subr.bf16.mxu0 %v1685
    %2264 = vmatpush1.bf16.msra.mxu0 %v1684
    %2265 = vmatprep.subr.bf16.mxu0 %v1689
    %2266 = vmatpush1.bf16.msra.mxu0 %v1688
    %2267 = vmatprep.subr.bf16.mxu0 %v1693
    %2268 = vmatpush1.bf16.msra.mxu0 %v1692
    %2269 = vmatprep.mubr.bf16.mxu0 %v391
    %2270 = vmatmul.mubr.bf16.gmra.mrb[0].mxu0 %v390
    %v2271 = vpop.f32.mrb[0].mxu0
    %v2272 = vadd.f32 %v2231, %v2271
    %v2273 = vpop.f32.mrb[0].mxu0
    %v2274 = vadd.f32 %v2233, %v2273
    %v2275 = vpop.f32.mrb[0].mxu0
    %v2276 = vpop.f32.mrb[0].mxu0
    %2277 = vdwg.mxu0
    %v2278 = vmax.f32 %v2108, 0.0
    %v2279 = vmax.f32 %v2110, 0.0
    %v2280 = vmax.f32 %v2272, 0.0
    %v2281 = vmax.f32 %v2274, 0.0
    %v2282 = vld [vmem:[%s5] sm:$0xf]
    %v2283 = vunpack.c.l.bf16 %v2282
    %v2285 = vlaneseq
    %v2286 = vshrl.u32 %v2285, 7
    %v2287 = vsub.s32 0, %v2286
    %v2288 = vrot.slane %v2283, %v2287
    %v2289 = vlaneseq
    %v2290 = vshrl.u32 %v2289, 7
    %v2291 = vsub.s32 2, %v2290
    %v2292 = vrot.slane %v2283, %v2291
    %v2293 = vlaneseq
    %v2294 = vshrl.u32 %v2293, 7
    %v2295 = vsub.s32 4, %v2294
    %v2296 = vrot.slane %v2283, %v2295
    %v2297 = vlaneseq
    %v2298 = vshrl.u32 %v2297, 7
    %v2299 = vsub.s32 6, %v2298
    %v2300 = vrot.slane %v2283, %v2299
    %v2305 = vlaneseq
    %v2306 = vshrl.u32 %v2305, 7
    %v2307 = vsub.s32 0, %v2306
    %v2308 = vrot.slane %v2288, %v2307
    %v2309 = vlaneseq
    %v2310 = vshrl.u32 %v2309, 7
    %v2311 = vsub.s32 0, %v2310
    %v2312 = vrot.slane %v2292, %v2311
    %v2313 = vlaneseq
    %v2314 = vshrl.u32 %v2313, 7
    %v2315 = vsub.s32 0, %v2314
    %v2316 = vrot.slane %v2296, %v2315
    %v2317 = vlaneseq
    %v2318 = vshrl.u32 %v2317, 7
    %v2319 = vsub.s32 0, %v2318
    %v2320 = vrot.slane %v2300, %v2319
    %v2321 = vmul.f32 %v2278, %v2308
    %v2322 = vmul.f32 %v2279, %v2312
    %v2323 = vmul.f32 %v2280, %v2316
    %v2324 = vmul.f32 %v2281, %v2320
    %v2325 = vadd.f32 %v2321, %v2322
    %v2326 = vadd.f32 %v2325, %v2323
    %v2327 = vadd.f32 %v2326, %v2324
    %2328 = vadd.xlane.f32.xlu0 %v2327
    %v2329 = vpop.xlane.xlu0 %2328
    %v2330 = vld [vmem:[#allocation2] sm:$0x1]
    %v2332 = vlaneseq
    %v2333 = vshrl.u32 %v2332, 7
    %v2334 = vsub.s32 0, %v2333
    %v2335 = vrot.slane %v2330, %v2334
    %v2337 = vadd.f32 %v2329, %v2335
    %vm2338 = vcmask 7168
    %2339 = vst.msk [vmem:[%s7] sm:$0xff] %vm2338, %v2337
    // Predicated region
    $region42: #{tpu_custom_call.1} parent=1 // pred_check
      _
    $region43: #{tpu_custom_call.1} parent=1 // pred_check_branch
      %2341 = sbr.rel (0) target = $region45
    $region44: #{tpu_custom_call.1} parent=1 // pred_region
      _
    $region45: #{tpu_custom_call.1} parent=1 // pred_fallthru
      _
    // Predicated region
    $region46: #{tpu_custom_call.1} parent=1 // pred_check
      _
    $region47: #{tpu_custom_call.1} parent=1 // pred_check_branch
      %2343 = sbr.rel (0) target = $region49
    $region48: #{tpu_custom_call.1} parent=1 // pred_region
      _
    $region49: #{tpu_custom_call.1} parent=1 // pred_fallthru
      _
    %2344 = vsyncpa [#allocation4], 1
    %2345 = vsyncpa [#allocation6], 1

</llo_original>
